<compile_context>
chip_gen: v6e
topology: v6e:2x2x1
jax: 0.10.0
libtpu: 0.0.40
codegen_flags: <defaults>
</compile_context>

<pallas_src>
import math
import functools

import jax
import jax.numpy as jnp
from jax.experimental import pallas as pl
from jax.experimental.pallas import tpu as pltpu


# ----------------------------- Pallas kernel --------------------------------
def gpt_stack_kernel(x_ref, w_qkv_ref, wo_ref, w1_ref, w2_ref, vecs_ref,
                     out_ref, act_ref, bias_ref, *, num_heads, head_size):
    """Whole GPT block stack.  grid=(L,); (B*S, D) activation carried in VMEM."""
    layer = pl.program_id(0)
    n_layers = pl.num_programs(0)

    b, s, d = x_ref.shape
    bs = b * s
    proj = num_heads * head_size
    fc = w1_ref.shape[2]

    # Layer 0: load embedding+PE input once, build the causal bias once.
    @pl.when(layer == 0)
    def _():
        act_ref[...] = x_ref[...].reshape(bs, d).astype(jnp.float32)
        row = jax.lax.broadcasted_iota(jnp.int32, (s, s), 0)
        col = jax.lax.broadcasted_iota(jnp.int32, (s, s), 1)
        bias_ref[...] = jnp.where(col <= row, 0.0, -1e30).astype(jnp.float32)

    x = act_ref[...]                          # (B*S, D) f32 carried activation
    x_bf = x.astype(jnp.bfloat16)
    vecs = vecs_ref[0]                        # (6, W) packed small vectors

    # ---- fused QKV projection (1/sqrt(head_size) already folded into W_q/b_q) --
    qkv = jnp.dot(x_bf, w_qkv_ref[0],
                  preferred_element_type=jnp.float32) + vecs[0:1, :3 * proj]
    qkv_bf = qkv.astype(jnp.bfloat16)
    q3 = qkv_bf[:, 0 * proj:1 * proj].reshape(b, s, proj)   # 128-aligned lane slices
    k3 = qkv_bf[:, 1 * proj:2 * proj].reshape(b, s, proj)
    v3 = qkv_bf[:, 2 * proj:3 * proj].reshape(b, s, proj)

    bias = bias_ref[...]                      # (S, S) additive causal bias (hoisted)

    # ---- attention: batched over B inside each head, no explicit transpose ----
    ctx_parts = []
    for h in range(num_heads):
        sl = slice(h * head_size, (h + 1) * head_size)
        qh, kh, vh = q3[:, :, sl], k3[:, :, sl], v3[:, :, sl]        # (B, S, hd)
        sc = jnp.einsum('bqd,bkd->bqk', qh, kh,
                        preferred_element_type=jnp.float32) + bias   # (B, S, S)
        m = jnp.max(sc, axis=-1, keepdims=True)
        p = jnp.exp(sc - m)
        p = p * pl.reciprocal(jnp.sum(p, axis=-1, keepdims=True), approx=True)
        ctx_parts.append(jnp.einsum('bqk,bkd->bqd', p.astype(jnp.bfloat16), vh,
                                    preferred_element_type=jnp.float32))

    # Lane-dense packed contexts (register concat, no masked VMEM stores).
    ctx = jnp.concatenate(ctx_parts, axis=-1).reshape(bs, proj).astype(jnp.bfloat16)

    # ---- output projection + residual + LayerNorm (eps=1e-5, torch default) ---
    attn = jnp.dot(ctx, wo_ref[0], preferred_element_type=jnp.float32) + vecs[1:2, :d]
    res = attn + x                            # adapt_residual = Identity (in==out)
    mean = jnp.mean(res, axis=-1, keepdims=True)
    cen = res - mean
    var = jnp.mean(cen * cen, axis=-1, keepdims=True)
    norm = cen * jax.lax.rsqrt(var + 1e-5)
    norm = norm * vecs[2:3, :d] + vecs[3:4, :d]

    # ---- feed-forward: Linear -> GELU -> Linear ------------------------------
    h1 = jnp.dot(norm.astype(jnp.bfloat16), w1_ref[0],
                 preferred_element_type=jnp.float32) + vecs[4:5, :fc]
    # TODO(synk): torch nn.GELU() default is exact erf-GELU; tanh approximation used.
    h1 = jax.nn.gelu(h1, approximate=True)
    ff = jnp.dot(h1.astype(jnp.bfloat16), w2_ref[0],
                 preferred_element_type=jnp.float32) + vecs[5:6, :d]

    out = ff + norm                           # dropout2 = identity (eval)
    act_ref[...] = out                        # carry to next layer

    @pl.when(layer == n_layers - 1)
    def _():
        out_ref[...] = out.reshape(b, s, d).astype(out_ref.dtype)


def gpt_layers_pallas(x, stacked, *, num_heads, head_size):
    """Run the fused block stack on (B, S, D) activations."""
    b, s, d = x.shape
    n_layers = stacked["w_qkv"].shape[0]

    def wspec(a):
        return pl.BlockSpec((1,) + a.shape[1:], lambda li: (li, 0, 0))

    kernel = functools.partial(gpt_stack_kernel,
                               num_heads=num_heads, head_size=head_size)

    return pl.pallas_call(
        kernel,
        out_shape=jax.ShapeDtypeStruct((b, s, d), x.dtype),
        grid=(n_layers,),
        in_specs=[pl.BlockSpec((b, s, d), lambda li: (0, 0, 0)),   # DMA'd once
                  wspec(stacked["w_qkv"]), wspec(stacked["wo"]),
                  wspec(stacked["w1"]), wspec(stacked["w2"]),
                  wspec(stacked["vecs"])],
        out_specs=pl.BlockSpec((b, s, d), lambda li: (0, 0, 0)),   # written once
        scratch_shapes=[pltpu.VMEM((b * s, d), jnp.float32),       # carried activation
                        pltpu.VMEM((s, s), jnp.float32)],          # hoisted causal bias
        compiler_params=pltpu.CompilerParams(
            dimension_semantics=("arbitrary",),
            vmem_limit_bytes=32 * 1024 * 1024),
    )(x, stacked["w_qkv"], stacked["wo"], stacked["w1"], stacked["w2"],
      stacked["vecs"])


# ------------------------------ Glue (plain JAX) ----------------------------
def sinusoidal_pe(max_len, d_model):
    # TODO(synk): PositionalEncoding source not given; standard additive sinusoidal assumed.
    pos = jnp.arange(max_len, dtype=jnp.float32)[:, None]
    i = jnp.arange(0, d_model, 2, dtype=jnp.float32)
    div = jnp.exp(-jnp.log(10000.0) * i / d_model)
    pe = jnp.zeros((max_len, d_model), jnp.float32)
    pe = pe.at[:, 0::2].set(jnp.sin(pos * div))
    pe = pe.at[:, 1::2].set(jnp.cos(pos * div))
    return pe


def init_params(key, *, vocab_size, max_seq_len, in_size, out_size,
                head_size, num_heads, fc_hidden_size, num_layers):
    assert in_size == out_size, "adapt_residual kept as Identity (in_size == out_size)"
    d, fc = out_size, fc_hidden_size
    proj = num_heads * head_size
    vec_w = max(3 * proj, fc, d)
    scale = 1.0 / math.sqrt(head_size)

    keys = jax.random.split(key, 1 + num_layers)

    def wn(k, shape):
        return jax.random.normal(k, shape, jnp.float32) * 0.02

    w_qkv_l, wo_l, w1_l, w2_l, vecs_l = [], [], [], [], []
    for li in range(num_layers):
        ks = jax.random.split(keys[1 + li], 12)
        wq = wn(ks[0], (d, proj)) * scale          # softmax scale folded into W_q
        wk = wn(ks[1], (d, proj))
        wv = wn(ks[2], (d, proj))
        w_qkv_l.append(jnp.concatenate([wq, wk, wv], axis=1).astype(jnp.bfloat16))
        wo_l.append(wn(ks[3], (proj, d)).astype(jnp.bfloat16))
        w1_l.append(wn(ks[4], (d, fc)).astype(jnp.bfloat16))
        w2_l.append(wn(ks[5], (fc, d)).astype(jnp.bfloat16))

        bq = wn(ks[6], (proj,)) * scale            # scale folded into b_q too
        bk = wn(ks[7], (proj,))
        bv = wn(ks[8], (proj,))
        bo = wn(ks[9], (d,))
        b1 = wn(ks[10], (fc,))
        b2 = wn(ks[11], (d,))
        gamma = jnp.ones((d,), jnp.float32)
        beta = jnp.zeros((d,), jnp.float32)

        def pad(v):
            return jnp.pad(v, (0, vec_w - v.shape[0]))

        vecs_l.append(jnp.stack([pad(jnp.concatenate([bq, bk, bv])),
                                 pad(bo), pad(gamma), pad(beta),
                                 pad(b1), pad(b2)]))

    stacked = {"w_qkv": jnp.stack(w_qkv_l), "wo": jnp.stack(wo_l),
               "w1": jnp.stack(w1_l), "w2": jnp.stack(w2_l),
               "vecs": jnp.stack(vecs_l)}
    return {
        "embedding": wn(keys[0], (vocab_size, in_size)),
        "pe": sinusoidal_pe(max_seq_len, in_size),
        "stacked": stacked,
    }


def gpt_layers_forward(tokens, params, *, num_heads, head_size):
    embed = params["embedding"][tokens]                       # (B, S, D) gather (glue)
    out = embed + params["pe"][: tokens.shape[1]][None]
    return gpt_layers_pallas(out, params["stacked"],
                             num_heads=num_heads, head_size=head_size)


# ----------------------------------- main ------------------------------------
if __name__ == "__main__":
    VOCAB = 64
    MAX_SEQ = 16
    B, S = 2, 8
    IN = OUT = 128          # lane-dense feature dim (multiple of 128)
    NUM_HEADS = 4
    HEAD = 32               # proj = num_heads * head_size = 128
    FC = 256                # for real v6e/v7x configs pick proj/FC as multiples of 256
    LAYERS = 2

    key = jax.random.PRNGKey(0)
    kp, kx = jax.random.split(key)
    params = init_params(kp, vocab_size=VOCAB, max_seq_len=MAX_SEQ,
                         in_size=IN, out_size=OUT, head_size=HEAD,
                         num_heads=NUM_HEADS, fc_hidden_size=FC,
                         num_layers=LAYERS)
    tokens = jax.random.randint(kx, (B, S), 0, VOCAB, dtype=jnp.int32)

    fwd = jax.jit(functools.partial(gpt_layers_forward,
                                    num_heads=NUM_HEADS, head_size=HEAD))
    out = jax.block_until_ready(fwd(tokens, params))
    assert out.shape == (B, S, OUT) and out.dtype == jnp.float32
    assert bool(jnp.all(jnp.isfinite(out)))
    print("KERNEL_OK")
</pallas_src>

<mosaic_0001>
module attributes {stable_mosaic.version = 11 : i64} {
  func.func @gpt_stack_kernel(%arg0: i32, %arg1: memref<2x8x128xf32, #tpu.memory_space<vmem>>, %arg2: memref<1x128x384xbf16, #tpu.memory_space<vmem>>, %arg3: memref<1x128x128xbf16, #tpu.memory_space<vmem>>, %arg4: memref<1x128x256xbf16, #tpu.memory_space<vmem>>, %arg5: memref<1x256x128xbf16, #tpu.memory_space<vmem>>, %arg6: memref<1x6x384xf32, #tpu.memory_space<vmem>>, %arg7: memref<2x8x128xf32, #tpu.memory_space<vmem>>, %arg8: memref<16x128xf32, #tpu.memory_space<vmem>>, %arg9: memref<8x8xf32, #tpu.memory_space<vmem>>) attributes {dimension_semantics = [#tpu.dimension_semantics<arbitrary>], iteration_bounds = array<i64: 2>, scalar_prefetch = 0 : i64, scratch_operands = 2 : i64, tpu.core_type = #tpu.core_type<tc>, window_params = [{pipeline_mode = #tpu.pipeline_mode<synchronous>, transform_indices = @transform_0, window_bounds = array<i64: 2, 8, 128>}, {transform_indices = @transform_1, window_bounds = array<i64: 1, 128, 384>}, {transform_indices = @transform_2, window_bounds = array<i64: 1, 128, 128>}, {transform_indices = @transform_3, window_bounds = array<i64: 1, 128, 256>}, {transform_indices = @transform_4, window_bounds = array<i64: 1, 256, 128>}, {transform_indices = @transform_5, window_bounds = array<i64: 1, 6, 384>}, {pipeline_mode = #tpu.pipeline_mode<synchronous>, transform_indices = @transform_6, window_bounds = array<i64: 2, 8, 128>}]} {
    %c0_i32 = arith.constant 0 : i32
    %0 = arith.cmpi eq, %arg0, %c0_i32 : i32
    %1 = arith.extui %0 : i1 to i32
    %c0_i32_0 = arith.constant 0 : i32
    %2 = arith.cmpi ne, %1, %c0_i32_0 : i32
    scf.if %2 {
      %c0_50 = arith.constant 0 : index
      %c0_51 = arith.constant 0 : index
      %c0_52 = arith.constant 0 : index
      %161 = vector.load %arg1[%c0_50, %c0_51, %c0_52] : memref<2x8x128xf32, #tpu.memory_space<vmem>>, vector<2x8x128xf32>
      %162 = vector.shape_cast %161 : vector<2x8x128xf32> to vector<16x128xf32>
      %c0_53 = arith.constant 0 : index
      %c0_54 = arith.constant 0 : index
      %163 = vector.load %arg8[%c0_53, %c0_54] : memref<16x128xf32, #tpu.memory_space<vmem>>, vector<16x128xf32>
      tpu.vector_store %arg8[%c0_53, %c0_54], %162 {strides = array<i32>} : memref<16x128xf32, #tpu.memory_space<vmem>>, vector<16x128xf32>,
      %164 = tpu.iota {dimensions = array<i32: 0>} : vector<8x8xi32>
      %165 = tpu.iota {dimensions = array<i32: 1>} : vector<8x8xi32>
      %166 = arith.cmpi sle, %165, %164 : vector<8x8xi32>
      %cst_55 = arith.constant 0.000000e+00 : f32
      %cst_56 = arith.constant -1.000000e+30 : f32
      %167 = vector.broadcast %cst_55 : f32 to vector<8x8xf32>
      %168 = vector.broadcast %cst_56 : f32 to vector<8x8xf32>
      %169 = arith.select %166, %167, %168 : vector<8x8xi1>, vector<8x8xf32>
      %c0_57 = arith.constant 0 : index
      %c0_58 = arith.constant 0 : index
      %170 = vector.load %arg9[%c0_57, %c0_58] : memref<8x8xf32, #tpu.memory_space<vmem>>, vector<8x8xf32>
      tpu.vector_store %arg9[%c0_57, %c0_58], %169 {strides = array<i32>} : memref<8x8xf32, #tpu.memory_space<vmem>>, vector<8x8xf32>,
    } else {
    }
    %c0 = arith.constant 0 : index
    %c0_1 = arith.constant 0 : index
    %3 = vector.load %arg8[%c0, %c0_1] : memref<16x128xf32, #tpu.memory_space<vmem>>, vector<16x128xf32>
    %4 = arith.truncf %3 : vector<16x128xf32> to vector<16x128xbf16>
    %c0_2 = arith.constant 0 : index
    %c0_3 = arith.constant 0 : index
    %c0_4 = arith.constant 0 : index
    %5 = vector.load %arg6[%c0_2, %c0_3, %c0_4] : memref<1x6x384xf32, #tpu.memory_space<vmem>>, vector<1x6x384xf32>
    %6 = vector.shape_cast %5 : vector<1x6x384xf32> to vector<6x384xf32>
    %c0_5 = arith.constant 0 : index
    %c0_6 = arith.constant 0 : index
    %c0_7 = arith.constant 0 : index
    %7 = vector.load %arg2[%c0_5, %c0_6, %c0_7] : memref<1x128x384xbf16, #tpu.memory_space<vmem>>, vector<1x128x384xbf16>
    %8 = vector.shape_cast %7 : vector<1x128x384xbf16> to vector<128x384xbf16>
    %cst = arith.constant dense<0.000000e+00> : vector<16x384xf32>
    %9 = tpu.matmul %4, %8, %cst {dimension_numbers = #tpu.dot_dimension_numbers<[1], [0], [0], [1], [0, 0, 1, 1], [], []>} : vector<16x128xbf16>, vector<128x384xbf16>, vector<16x384xf32> -> vector<16x384xf32>
    %10 = vector.extract_strided_slice %6 {offsets = [0, 0], sizes = [1, 384], strides = [1, 1]} : vector<6x384xf32> to vector<1x384xf32>
    %11 = vector.broadcast %10 : vector<1x384xf32> to vector<16x384xf32>
    %12 = arith.addf %9, %11 : vector<16x384xf32>
    %13 = arith.truncf %12 : vector<16x384xf32> to vector<16x384xbf16>
    %14 = vector.extract_strided_slice %13 {offsets = [0, 0], sizes = [16, 128], strides = [1, 1]} : vector<16x384xbf16> to vector<16x128xbf16>
    %15 = vector.shape_cast %14 : vector<16x128xbf16> to vector<2x8x128xbf16>
    %16 = vector.extract_strided_slice %13 {offsets = [0, 128], sizes = [16, 128], strides = [1, 1]} : vector<16x384xbf16> to vector<16x128xbf16>
    %17 = vector.shape_cast %16 : vector<16x128xbf16> to vector<2x8x128xbf16>
    %18 = vector.extract_strided_slice %13 {offsets = [0, 256], sizes = [16, 128], strides = [1, 1]} : vector<16x384xbf16> to vector<16x128xbf16>
    %19 = vector.shape_cast %18 : vector<16x128xbf16> to vector<2x8x128xbf16>
    %c0_8 = arith.constant 0 : index
    %c0_9 = arith.constant 0 : index
    %20 = vector.load %arg9[%c0_8, %c0_9] : memref<8x8xf32, #tpu.memory_space<vmem>>, vector<8x8xf32>
    %21 = vector.extract_strided_slice %15 {offsets = [0, 0, 0], sizes = [2, 8, 32], strides = [1, 1, 1]} : vector<2x8x128xbf16> to vector<2x8x32xbf16>
    %22 = vector.extract_strided_slice %17 {offsets = [0, 0, 0], sizes = [2, 8, 32], strides = [1, 1, 1]} : vector<2x8x128xbf16> to vector<2x8x32xbf16>
    %23 = vector.extract_strided_slice %19 {offsets = [0, 0, 0], sizes = [2, 8, 32], strides = [1, 1, 1]} : vector<2x8x128xbf16> to vector<2x8x32xbf16>
    "tpu.trace_start"() <{level = 10 : i32, message = "bqd,bkd->bqk"}> : () -> ()
    %cst_10 = arith.constant dense<0.000000e+00> : vector<2x8x8xf32>
    %24 = tpu.matmul %21, %22, %cst_10 {dimension_numbers = #tpu.dot_dimension_numbers<[2], [2], [1], [1], [0, 0, 0, 1, 1, 1], [0], [0]>} : vector<2x8x32xbf16>, vector<2x8x32xbf16>, vector<2x8x8xf32> -> vector<2x8x8xf32>
    "tpu.trace_stop"() : () -> ()
    %25 = vector.shape_cast %20 : vector<8x8xf32> to vector<1x8x8xf32>
    %26 = vector.broadcast %25 : vector<1x8x8xf32> to vector<2x8x8xf32>
    %27 = arith.addf %24, %26 : vector<2x8x8xf32>
    %cst_11 = arith.constant dense<0xFF800000> : vector<2x8xf32>
    %28 = vector.multi_reduction <maximumf>, %27, %cst_11 [2] : vector<2x8x8xf32> to vector<2x8xf32>
    %29 = vector.shape_cast %28 : vector<2x8xf32> to vector<2x8x1xf32>
    %30 = vector.broadcast %29 : vector<2x8x1xf32> to vector<2x8x8xf32>
    %31 = arith.subf %27, %30 : vector<2x8x8xf32>
    %32 = math.exp %31 : vector<2x8x8xf32>
    %cst_12 = arith.constant dense<0.000000e+00> : vector<2x8xf32>
    %33 = vector.multi_reduction <add>, %32, %cst_12 [2] : vector<2x8x8xf32> to vector<2x8xf32>
    %34 = vector.shape_cast %33 : vector<2x8xf32> to vector<2x8x1xf32>
    %35 = tpu.reciprocal %34 {approx = true} : vector<2x8x1xf32> -> vector<2x8x1xf32>
    %36 = vector.broadcast %35 : vector<2x8x1xf32> to vector<2x8x8xf32>
    %37 = arith.mulf %32, %36 : vector<2x8x8xf32>
    %38 = arith.truncf %37 : vector<2x8x8xf32> to vector<2x8x8xbf16>
    "tpu.trace_start"() <{level = 10 : i32, message = "bqk,bkd->bqd"}> : () -> ()
    %cst_13 = arith.constant dense<0.000000e+00> : vector<2x8x32xf32>
    %39 = tpu.matmul %38, %23, %cst_13 {dimension_numbers = #tpu.dot_dimension_numbers<[2], [1], [1], [2], [0, 0, 0, 1, 1, 2], [0], [0]>} : vector<2x8x8xbf16>, vector<2x8x32xbf16>, vector<2x8x32xf32> -> vector<2x8x32xf32>
    "tpu.trace_stop"() : () -> ()
    %40 = vector.extract_strided_slice %15 {offsets = [0, 0, 32], sizes = [2, 8, 32], strides = [1, 1, 1]} : vector<2x8x128xbf16> to vector<2x8x32xbf16>
    %41 = vector.extract_strided_slice %17 {offsets = [0, 0, 32], sizes = [2, 8, 32], strides = [1, 1, 1]} : vector<2x8x128xbf16> to vector<2x8x32xbf16>
    %42 = vector.extract_strided_slice %19 {offsets = [0, 0, 32], sizes = [2, 8, 32], strides = [1, 1, 1]} : vector<2x8x128xbf16> to vector<2x8x32xbf16>
    "tpu.trace_start"() <{level = 10 : i32, message = "bqd,bkd->bqk"}> : () -> ()
    %cst_14 = arith.constant dense<0.000000e+00> : vector<2x8x8xf32>
    %43 = tpu.matmul %40, %41, %cst_14 {dimension_numbers = #tpu.dot_dimension_numbers<[2], [2], [1], [1], [0, 0, 0, 1, 1, 1], [0], [0]>} : vector<2x8x32xbf16>, vector<2x8x32xbf16>, vector<2x8x8xf32> -> vector<2x8x8xf32>
    "tpu.trace_stop"() : () -> ()
    %44 = vector.shape_cast %20 : vector<8x8xf32> to vector<1x8x8xf32>
    %45 = vector.broadcast %44 : vector<1x8x8xf32> to vector<2x8x8xf32>
    %46 = arith.addf %43, %45 : vector<2x8x8xf32>
    %cst_15 = arith.constant dense<0xFF800000> : vector<2x8xf32>
    %47 = vector.multi_reduction <maximumf>, %46, %cst_15 [2] : vector<2x8x8xf32> to vector<2x8xf32>
    %48 = vector.shape_cast %47 : vector<2x8xf32> to vector<2x8x1xf32>
    %49 = vector.broadcast %48 : vector<2x8x1xf32> to vector<2x8x8xf32>
    %50 = arith.subf %46, %49 : vector<2x8x8xf32>
    %51 = math.exp %50 : vector<2x8x8xf32>
    %cst_16 = arith.constant dense<0.000000e+00> : vector<2x8xf32>
    %52 = vector.multi_reduction <add>, %51, %cst_16 [2] : vector<2x8x8xf32> to vector<2x8xf32>
    %53 = vector.shape_cast %52 : vector<2x8xf32> to vector<2x8x1xf32>
    %54 = tpu.reciprocal %53 {approx = true} : vector<2x8x1xf32> -> vector<2x8x1xf32>
    %55 = vector.broadcast %54 : vector<2x8x1xf32> to vector<2x8x8xf32>
    %56 = arith.mulf %51, %55 : vector<2x8x8xf32>
    %57 = arith.truncf %56 : vector<2x8x8xf32> to vector<2x8x8xbf16>
    "tpu.trace_start"() <{level = 10 : i32, message = "bqk,bkd->bqd"}> : () -> ()
    %cst_17 = arith.constant dense<0.000000e+00> : vector<2x8x32xf32>
    %58 = tpu.matmul %57, %42, %cst_17 {dimension_numbers = #tpu.dot_dimension_numbers<[2], [1], [1], [2], [0, 0, 0, 1, 1, 2], [0], [0]>} : vector<2x8x8xbf16>, vector<2x8x32xbf16>, vector<2x8x32xf32> -> vector<2x8x32xf32>
    "tpu.trace_stop"() : () -> ()
    %59 = vector.extract_strided_slice %15 {offsets = [0, 0, 64], sizes = [2, 8, 32], strides = [1, 1, 1]} : vector<2x8x128xbf16> to vector<2x8x32xbf16>
    %60 = vector.extract_strided_slice %17 {offsets = [0, 0, 64], sizes = [2, 8, 32], strides = [1, 1, 1]} : vector<2x8x128xbf16> to vector<2x8x32xbf16>
    %61 = vector.extract_strided_slice %19 {offsets = [0, 0, 64], sizes = [2, 8, 32], strides = [1, 1, 1]} : vector<2x8x128xbf16> to vector<2x8x32xbf16>
    "tpu.trace_start"() <{level = 10 : i32, message = "bqd,bkd->bqk"}> : () -> ()
    %cst_18 = arith.constant dense<0.000000e+00> : vector<2x8x8xf32>
    %62 = tpu.matmul %59, %60, %cst_18 {dimension_numbers = #tpu.dot_dimension_numbers<[2], [2], [1], [1], [0, 0, 0, 1, 1, 1], [0], [0]>} : vector<2x8x32xbf16>, vector<2x8x32xbf16>, vector<2x8x8xf32> -> vector<2x8x8xf32>
    "tpu.trace_stop"() : () -> ()
    %63 = vector.shape_cast %20 : vector<8x8xf32> to vector<1x8x8xf32>
    %64 = vector.broadcast %63 : vector<1x8x8xf32> to vector<2x8x8xf32>
    %65 = arith.addf %62, %64 : vector<2x8x8xf32>
    %cst_19 = arith.constant dense<0xFF800000> : vector<2x8xf32>
    %66 = vector.multi_reduction <maximumf>, %65, %cst_19 [2] : vector<2x8x8xf32> to vector<2x8xf32>
    %67 = vector.shape_cast %66 : vector<2x8xf32> to vector<2x8x1xf32>
    %68 = vector.broadcast %67 : vector<2x8x1xf32> to vector<2x8x8xf32>
    %69 = arith.subf %65, %68 : vector<2x8x8xf32>
    %70 = math.exp %69 : vector<2x8x8xf32>
    %cst_20 = arith.constant dense<0.000000e+00> : vector<2x8xf32>
    %71 = vector.multi_reduction <add>, %70, %cst_20 [2] : vector<2x8x8xf32> to vector<2x8xf32>
    %72 = vector.shape_cast %71 : vector<2x8xf32> to vector<2x8x1xf32>
    %73 = tpu.reciprocal %72 {approx = true} : vector<2x8x1xf32> -> vector<2x8x1xf32>
    %74 = vector.broadcast %73 : vector<2x8x1xf32> to vector<2x8x8xf32>
    %75 = arith.mulf %70, %74 : vector<2x8x8xf32>
    %76 = arith.truncf %75 : vector<2x8x8xf32> to vector<2x8x8xbf16>
    "tpu.trace_start"() <{level = 10 : i32, message = "bqk,bkd->bqd"}> : () -> ()
    %cst_21 = arith.constant dense<0.000000e+00> : vector<2x8x32xf32>
    %77 = tpu.matmul %76, %61, %cst_21 {dimension_numbers = #tpu.dot_dimension_numbers<[2], [1], [1], [2], [0, 0, 0, 1, 1, 2], [0], [0]>} : vector<2x8x8xbf16>, vector<2x8x32xbf16>, vector<2x8x32xf32> -> vector<2x8x32xf32>
    "tpu.trace_stop"() : () -> ()
    %78 = vector.extract_strided_slice %15 {offsets = [0, 0, 96], sizes = [2, 8, 32], strides = [1, 1, 1]} : vector<2x8x128xbf16> to vector<2x8x32xbf16>
    %79 = vector.extract_strided_slice %17 {offsets = [0, 0, 96], sizes = [2, 8, 32], strides = [1, 1, 1]} : vector<2x8x128xbf16> to vector<2x8x32xbf16>
    %80 = vector.extract_strided_slice %19 {offsets = [0, 0, 96], sizes = [2, 8, 32], strides = [1, 1, 1]} : vector<2x8x128xbf16> to vector<2x8x32xbf16>
    "tpu.trace_start"() <{level = 10 : i32, message = "bqd,bkd->bqk"}> : () -> ()
    %cst_22 = arith.constant dense<0.000000e+00> : vector<2x8x8xf32>
    %81 = tpu.matmul %78, %79, %cst_22 {dimension_numbers = #tpu.dot_dimension_numbers<[2], [2], [1], [1], [0, 0, 0, 1, 1, 1], [0], [0]>} : vector<2x8x32xbf16>, vector<2x8x32xbf16>, vector<2x8x8xf32> -> vector<2x8x8xf32>
    "tpu.trace_stop"() : () -> ()
    %82 = vector.shape_cast %20 : vector<8x8xf32> to vector<1x8x8xf32>
    %83 = vector.broadcast %82 : vector<1x8x8xf32> to vector<2x8x8xf32>
    %84 = arith.addf %81, %83 : vector<2x8x8xf32>
    %cst_23 = arith.constant dense<0xFF800000> : vector<2x8xf32>
    %85 = vector.multi_reduction <maximumf>, %84, %cst_23 [2] : vector<2x8x8xf32> to vector<2x8xf32>
    %86 = vector.shape_cast %85 : vector<2x8xf32> to vector<2x8x1xf32>
    %87 = vector.broadcast %86 : vector<2x8x1xf32> to vector<2x8x8xf32>
    %88 = arith.subf %84, %87 : vector<2x8x8xf32>
    %89 = math.exp %88 : vector<2x8x8xf32>
    %cst_24 = arith.constant dense<0.000000e+00> : vector<2x8xf32>
    %90 = vector.multi_reduction <add>, %89, %cst_24 [2] : vector<2x8x8xf32> to vector<2x8xf32>
    %91 = vector.shape_cast %90 : vector<2x8xf32> to vector<2x8x1xf32>
    %92 = tpu.reciprocal %91 {approx = true} : vector<2x8x1xf32> -> vector<2x8x1xf32>
    %93 = vector.broadcast %92 : vector<2x8x1xf32> to vector<2x8x8xf32>
    %94 = arith.mulf %89, %93 : vector<2x8x8xf32>
    %95 = arith.truncf %94 : vector<2x8x8xf32> to vector<2x8x8xbf16>
    "tpu.trace_start"() <{level = 10 : i32, message = "bqk,bkd->bqd"}> : () -> ()
    %cst_25 = arith.constant dense<0.000000e+00> : vector<2x8x32xf32>
    %96 = tpu.matmul %95, %80, %cst_25 {dimension_numbers = #tpu.dot_dimension_numbers<[2], [1], [1], [2], [0, 0, 0, 1, 1, 2], [0], [0]>} : vector<2x8x8xbf16>, vector<2x8x32xbf16>, vector<2x8x32xf32> -> vector<2x8x32xf32>
    "tpu.trace_stop"() : () -> ()
    %97 = tpu.concatenate %39, %58, %77, %96 in 2 : vector<2x8x32xf32>, vector<2x8x32xf32>, vector<2x8x32xf32>, vector<2x8x32xf32> -> vector<2x8x128xf32>
    %98 = vector.shape_cast %97 : vector<2x8x128xf32> to vector<16x128xf32>
    %99 = arith.truncf %98 : vector<16x128xf32> to vector<16x128xbf16>
    %c0_26 = arith.constant 0 : index
    %c0_27 = arith.constant 0 : index
    %c0_28 = arith.constant 0 : index
    %100 = vector.load %arg3[%c0_26, %c0_27, %c0_28] : memref<1x128x128xbf16, #tpu.memory_space<vmem>>, vector<1x128x128xbf16>
    %101 = vector.shape_cast %100 : vector<1x128x128xbf16> to vector<128x128xbf16>
    %cst_29 = arith.constant dense<0.000000e+00> : vector<16x128xf32>
    %102 = tpu.matmul %99, %101, %cst_29 {dimension_numbers = #tpu.dot_dimension_numbers<[1], [0], [0], [1], [0, 0, 1, 1], [], []>} : vector<16x128xbf16>, vector<128x128xbf16>, vector<16x128xf32> -> vector<16x128xf32>
    %103 = vector.extract_strided_slice %6 {offsets = [1, 0], sizes = [1, 128], strides = [1, 1]} : vector<6x384xf32> to vector<1x128xf32>
    %104 = vector.broadcast %103 : vector<1x128xf32> to vector<16x128xf32>
    %105 = arith.addf %102, %104 : vector<16x128xf32>
    %106 = arith.addf %105, %3 : vector<16x128xf32>
    %cst_30 = arith.constant dense<0.000000e+00> : vector<16xf32>
    %107 = vector.multi_reduction <add>, %106, %cst_30 [1] : vector<16x128xf32> to vector<16xf32>
    %108 = vector.shape_cast %107 : vector<16xf32> to vector<16x1xf32>
    %cst_31 = arith.constant 1.280000e+02 : f32
    %109 = vector.broadcast %cst_31 : f32 to vector<16x1xf32>
    %110 = arith.divf %108, %109 : vector<16x1xf32>
    %111 = vector.broadcast %110 : vector<16x1xf32> to vector<16x128xf32>
    %112 = arith.subf %106, %111 : vector<16x128xf32>
    %113 = arith.mulf %112, %112 : vector<16x128xf32>
    %cst_32 = arith.constant dense<0.000000e+00> : vector<16xf32>
    %114 = vector.multi_reduction <add>, %113, %cst_32 [1] : vector<16x128xf32> to vector<16xf32>
    %115 = vector.shape_cast %114 : vector<16xf32> to vector<16x1xf32>
    %cst_33 = arith.constant 1.280000e+02 : f32
    %116 = vector.broadcast %cst_33 : f32 to vector<16x1xf32>
    %117 = arith.divf %115, %116 : vector<16x1xf32>
    %cst_34 = arith.constant 9.99999974E-6 : f32
    %118 = vector.broadcast %cst_34 : f32 to vector<16x1xf32>
    %119 = arith.addf %117, %118 : vector<16x1xf32>
    %120 = math.rsqrt %119 : vector<16x1xf32>
    %121 = vector.broadcast %120 : vector<16x1xf32> to vector<16x128xf32>
    %122 = arith.mulf %112, %121 : vector<16x128xf32>
    %123 = vector.extract_strided_slice %6 {offsets = [2, 0], sizes = [1, 128], strides = [1, 1]} : vector<6x384xf32> to vector<1x128xf32>
    %124 = vector.broadcast %123 : vector<1x128xf32> to vector<16x128xf32>
    %125 = arith.mulf %122, %124 : vector<16x128xf32>
    %126 = vector.extract_strided_slice %6 {offsets = [3, 0], sizes = [1, 128], strides = [1, 1]} : vector<6x384xf32> to vector<1x128xf32>
    %127 = vector.broadcast %126 : vector<1x128xf32> to vector<16x128xf32>
    %128 = arith.addf %125, %127 : vector<16x128xf32>
    %129 = arith.truncf %128 : vector<16x128xf32> to vector<16x128xbf16>
    %c0_35 = arith.constant 0 : index
    %c0_36 = arith.constant 0 : index
    %c0_37 = arith.constant 0 : index
    %130 = vector.load %arg4[%c0_35, %c0_36, %c0_37] : memref<1x128x256xbf16, #tpu.memory_space<vmem>>, vector<1x128x256xbf16>
    %131 = vector.shape_cast %130 : vector<1x128x256xbf16> to vector<128x256xbf16>
    %cst_38 = arith.constant dense<0.000000e+00> : vector<16x256xf32>
    %132 = tpu.matmul %129, %131, %cst_38 {dimension_numbers = #tpu.dot_dimension_numbers<[1], [0], [0], [1], [0, 0, 1, 1], [], []>} : vector<16x128xbf16>, vector<128x256xbf16>, vector<16x256xf32> -> vector<16x256xf32>
    %133 = vector.extract_strided_slice %6 {offsets = [4, 0], sizes = [1, 256], strides = [1, 1]} : vector<6x384xf32> to vector<1x256xf32>
    %134 = vector.broadcast %133 : vector<1x256xf32> to vector<16x256xf32>
    %135 = arith.addf %132, %134 : vector<16x256xf32>
    %136 = arith.mulf %135, %135 : vector<16x256xf32>
    %137 = arith.mulf %135, %136 : vector<16x256xf32>
    %cst_39 = arith.constant 4.471500e-02 : f32
    %138 = vector.broadcast %cst_39 : f32 to vector<16x256xf32>
    %139 = arith.mulf %138, %137 : vector<16x256xf32>
    %140 = arith.addf %135, %139 : vector<16x256xf32>
    %cst_40 = arith.constant 0.797884583 : f32
    %141 = vector.broadcast %cst_40 : f32 to vector<16x256xf32>
    %142 = arith.mulf %141, %140 : vector<16x256xf32>
    %143 = math.tanh %142 : vector<16x256xf32>
    %cst_41 = arith.constant 1.000000e+00 : f32
    %144 = vector.broadcast %cst_41 : f32 to vector<16x256xf32>
    %145 = arith.addf %144, %143 : vector<16x256xf32>
    %cst_42 = arith.constant 5.000000e-01 : f32
    %146 = vector.broadcast %cst_42 : f32 to vector<16x256xf32>
    %147 = arith.mulf %146, %145 : vector<16x256xf32>
    %148 = arith.mulf %135, %147 : vector<16x256xf32>
    %149 = arith.truncf %148 : vector<16x256xf32> to vector<16x256xbf16>
    %c0_43 = arith.constant 0 : index
    %c0_44 = arith.constant 0 : index
    %c0_45 = arith.constant 0 : index
    %150 = vector.load %arg5[%c0_43, %c0_44, %c0_45] : memref<1x256x128xbf16, #tpu.memory_space<vmem>>, vector<1x256x128xbf16>
    %151 = vector.shape_cast %150 : vector<1x256x128xbf16> to vector<256x128xbf16>
    %cst_46 = arith.constant dense<0.000000e+00> : vector<16x128xf32>
    %152 = tpu.matmul %149, %151, %cst_46 {dimension_numbers = #tpu.dot_dimension_numbers<[1], [0], [0], [1], [0, 0, 1, 1], [], []>} : vector<16x256xbf16>, vector<256x128xbf16>, vector<16x128xf32> -> vector<16x128xf32>
    %153 = vector.extract_strided_slice %6 {offsets = [5, 0], sizes = [1, 128], strides = [1, 1]} : vector<6x384xf32> to vector<1x128xf32>
    %154 = vector.broadcast %153 : vector<1x128xf32> to vector<16x128xf32>
    %155 = arith.addf %152, %154 : vector<16x128xf32>
    %156 = arith.addf %155, %128 : vector<16x128xf32>
    %c0_47 = arith.constant 0 : index
    %c0_48 = arith.constant 0 : index
    %157 = vector.load %arg8[%c0_47, %c0_48] : memref<16x128xf32, #tpu.memory_space<vmem>>, vector<16x128xf32>
    tpu.vector_store %arg8[%c0_47, %c0_48], %156 {strides = array<i32>} : memref<16x128xf32, #tpu.memory_space<vmem>>, vector<16x128xf32>,
    %c1_i32 = arith.constant 1 : i32
    %158 = arith.cmpi eq, %arg0, %c1_i32 : i32
    %159 = arith.extui %158 : i1 to i32
    %c0_i32_49 = arith.constant 0 : i32
    %160 = arith.cmpi ne, %159, %c0_i32_49 : i32
    scf.if %160 {
      %161 = vector.shape_cast %156 : vector<16x128xf32> to vector<2x8x128xf32>
      %c0_50 = arith.constant 0 : index
      %c0_51 = arith.constant 0 : index
      %c0_52 = arith.constant 0 : index
      %162 = vector.load %arg7[%c0_50, %c0_51, %c0_52] : memref<2x8x128xf32, #tpu.memory_space<vmem>>, vector<2x8x128xf32>
      tpu.vector_store %arg7[%c0_50, %c0_51, %c0_52], %161 {strides = array<i32>} : memref<2x8x128xf32, #tpu.memory_space<vmem>>, vector<2x8x128xf32>,
    } else {
    }
    return
  }
  func.func @transform_0(%arg0: i32) -> (i32, i32, i32) {
    %c0_i32 = arith.constant 0 : i32
    %c0_i32_0 = arith.constant 0 : i32
    %c0_i32_1 = arith.constant 0 : i32
    %c0_i32_2 = arith.constant 0 : i32
    return %c0_i32, %c0_i32_0, %c0_i32_1 : i32, i32, i32
  }
  func.func @transform_1(%arg0: i32) -> (i32, i32, i32) {
    %c0_i32 = arith.constant 0 : i32
    %c0_i32_0 = arith.constant 0 : i32
    %c0_i32_1 = arith.constant 0 : i32
    return %arg0, %c0_i32, %c0_i32_0 : i32, i32, i32
  }
  func.func @transform_2(%arg0: i32) -> (i32, i32, i32) {
    %c0_i32 = arith.constant 0 : i32
    %c0_i32_0 = arith.constant 0 : i32
    %c0_i32_1 = arith.constant 0 : i32
    return %arg0, %c0_i32, %c0_i32_0 : i32, i32, i32
  }
  func.func @transform_3(%arg0: i32) -> (i32, i32, i32) {
    %c0_i32 = arith.constant 0 : i32
    %c0_i32_0 = arith.constant 0 : i32
    %c0_i32_1 = arith.constant 0 : i32
    return %arg0, %c0_i32, %c0_i32_0 : i32, i32, i32
  }
  func.func @transform_4(%arg0: i32) -> (i32, i32, i32) {
    %c0_i32 = arith.constant 0 : i32
    %c0_i32_0 = arith.constant 0 : i32
    %c0_i32_1 = arith.constant 0 : i32
    return %arg0, %c0_i32, %c0_i32_0 : i32, i32, i32
  }
  func.func @transform_5(%arg0: i32) -> (i32, i32, i32) {
    %c0_i32 = arith.constant 0 : i32
    %c0_i32_0 = arith.constant 0 : i32
    %c0_i32_1 = arith.constant 0 : i32
    return %arg0, %c0_i32, %c0_i32_0 : i32, i32, i32
  }
  func.func @transform_6(%arg0: i32) -> (i32, i32, i32) {
    %c0_i32 = arith.constant 0 : i32
    %c0_i32_0 = arith.constant 0 : i32
    %c0_i32_1 = arith.constant 0 : i32
    %c0_i32_2 = arith.constant 0 : i32
    return %c0_i32, %c0_i32_0, %c0_i32_1 : i32, i32, i32
  }
}

</mosaic_0001>

<llo_original>
// kernel: gpt_layers_forward.1
$region0: #{gpt_layers_forward.1}
  #allocation0 [shape = 'u32[]', space=smem, size = 0x4, offset = 0x4, fixed_abs, tag = 'smem constant byte address 0x4 - core index']
  #allocation1 [shape = 'u32[144,128]{1,0:T(1,128)}', space=vmem, size = 0x12000, scoped, tag = 'internal scratch']
  #allocation2 [shape = 'f32[16,128]{1,0:T(8,128)}', space=vmem, size = 0x2000, scoped, tag = 'scratch operand']
  #allocation3 [shape = 'f32[8,8]{1,0:T(8,128)}', space=vmem, size = 0x1000, scoped, tag = 'scratch operand']
  %s0 = inlined_call_operand.vmem [shape: f32[2,8,128], index: 0, kind: input, shape index: {}]
  %s1 = inlined_call_operand.hbm [shape: bf16[2,128,384], index: 1, kind: input, shape index: {}]
  %s2 = inlined_call_operand.hbm [shape: bf16[2,128,128], index: 2, kind: input, shape index: {}]
  %s3 = inlined_call_operand.vmem [shape: bf16[2,128,256], index: 3, kind: input, shape index: {}]
  %s4 = inlined_call_operand.hbm [shape: bf16[2,256,128], index: 4, kind: input, shape index: {}]
  %s5 = inlined_call_operand.vmem [shape: f32[2,6,384], index: 5, kind: input, shape index: {}]
  %s6 = inlined_call_operand.hbm [shape: f32[2,8,128], index: 6, kind: output, shape index: {}]
  %s7 = sld [smem:[#allocation0]]
  $region77: #{gpt_layers_forward.1} parent=0
    _
  %s9 = ssub.s32 1, %s7
  %s10 = scalar_select 0, %s9, %s7
  $region1: #{gpt_layers_forward.1} parent=0
    #allocation4 [shape = 'u8[196608]{0}', space=vmem, size = 0x30000, scoped, tag = 'input window, operand 1']
    #allocation5 [shape = 's32[2]{0}', space=sflag, size = 0x8, scoped, tag = 'scoped memory for gpt_layers_forward.1']
    #allocation6 [shape = 's32[2]{0}', space=sflag, size = 0x8, scoped, tag = 'scoped memory for gpt_layers_forward.1']
    #allocation7 [shape = 'u8[65536]{0}', space=vmem, size = 0x10000, scoped, tag = 'input window, operand 2']
    #allocation8 [shape = 's32[2]{0}', space=sflag, size = 0x8, scoped, tag = 'scoped memory for gpt_layers_forward.1']
    #allocation9 [shape = 'u8[131072]{0}', space=vmem, size = 0x20000, scoped, tag = 'input window, operand 4']
    #allocation10 [shape = 'u8[8192]{0}', space=vmem, size = 0x2000, scoped, tag = 'output window, operand 0, single buffered']
    %11 = vsyncpa [#allocation5], 0
    %s12 = scalar_lea.sflag [#allocation5], 1
    %13 = vsyncpa %s12, 0
    %14 = vsyncpa [#allocation8], 0
    %s15 = scalar_lea.sflag [#allocation8], 1
    %16 = vsyncpa %s15, 0
    %17 = vsyncpa [#allocation6], 0
    loop: start=0, step=1, limit=4
    $region2: #{gpt_layers_forward.1} parent=1 // loop_pre_header
      _
    $region3: #{gpt_layers_forward.1} parent=1 // loop_header
      %s19 = sphi 0, %s23
      %p20 = scmp.ge.s32.totalorder %s19, 4
      %s27 = sphi 0, %s27
      %s29 = sphi 0, %s27
      %s30 = sphi 0, %s29
      %s44 = sphi 0, %s30
      %s50 = sphi 0, %s52
      %s53 = sphi 0, %s50
      %s54 = sphi 0, %s53
      %s70 = sphi 0, %s54
      %s76 = sphi 0, %s78
      %s79 = sphi 0, %s76
      %s80 = sphi 0, %s79
      %s96 = sphi 0, %s80
      %s102 = sphi 0, %s104
      %s105 = sphi 0, %s102
      %s106 = sphi 0, %s105
      %s122 = sphi 0, %s106
      %s128 = sphi 0, %s130
      %s131 = sphi 0, %s128
      %s132 = sphi 0, %s131
      %s148 = sphi 0, %s132
      %s154 = sphi 0, %s156
      %s157 = sphi 0, %s154
      %s158 = sphi 0, %s157
      %s174 = sphi 0, %s158
      %s178 = sphi 0, %s178
      %s180 = sphi 0, %s178
      %s181 = sphi 0, %s180
      %s195 = sphi 0, %s181
    $region4: #{gpt_layers_forward.1} parent=1 // loop_header_branch
      %22 = sbr.rel (%p20) target = $region8
    $region5: #{gpt_layers_forward.1} parent=1 // loop_body
      %s24 = ssub.s32 %s19, 1
      %s25 = ssub.s32 %s19, 2
      %s26 = sadd.s32 %s19, 1
      %s28 = sadd.s32 %s27, 1
      %p31 = scmp.eq.s32.totalorder %s19, 1
      %p32 = scmp.ne.s32.totalorder %s27, %s29
      %p33 = scmp.eq.s32.totalorder %s19, 0
      %p34 = por %p32, %p33
      %p35 = scmp.ne.s32.totalorder %s27, %s29
      %p36 = scmp.eq.s32.totalorder %s24, 1
      %p37 = por %p35, %p36
      %p38 = scmp.ne.s32.totalorder %s29, %s30
      %p39 = scmp.eq.s32.totalorder %s24, 0
      %p40 = por %p38, %p39
      %p41 = scmp.ne.s32.totalorder %s29, %s30
      %p42 = scmp.eq.s32.totalorder %s25, 1
      %p43 = por %p41, %p42
      %p45 = scmp.ne.s32.totalorder %s30, %s44
      %p46 = scmp.eq.s32.totalorder %s25, 0
      %p47 = por %p45, %p46
      %s48 = ssub.s32 %s19, %s26
      %p49 = scmp.eq.s32.totalorder %s48, 0
      %s51 = sadd.s32 %s50, 1
      %s52 = scalar_select %p49, %s50, %s51
      %p55 = pneg %p49
      %p56 = scmp.eq.s32.totalorder %s19, 1
      %p57 = por %p55, %p56
      %p58 = scmp.ne.s32.totalorder %s50, %s53
      %p59 = scmp.eq.s32.totalorder %s19, 0
      %p60 = por %p58, %p59
      %p61 = scmp.ne.s32.totalorder %s50, %s53
      %p62 = scmp.eq.s32.totalorder %s24, 1
      %p63 = por %p61, %p62
      %p64 = scmp.ne.s32.totalorder %s53, %s54
      %p65 = scmp.eq.s32.totalorder %s24, 0
      %p66 = por %p64, %p65
      %p67 = scmp.ne.s32.totalorder %s53, %s54
      %p68 = scmp.eq.s32.totalorder %s25, 1
      %p69 = por %p67, %p68
      %p71 = scmp.ne.s32.totalorder %s54, %s70
      %p72 = scmp.eq.s32.totalorder %s25, 0
      %p73 = por %p71, %p72
      %s74 = ssub.s32 %s19, %s26
      %p75 = scmp.eq.s32.totalorder %s74, 0
      %s77 = sadd.s32 %s76, 1
      %s78 = scalar_select %p75, %s76, %s77
      %p81 = pneg %p75
      %p82 = scmp.eq.s32.totalorder %s19, 1
      %p83 = por %p81, %p82
      %p84 = scmp.ne.s32.totalorder %s76, %s79
      %p85 = scmp.eq.s32.totalorder %s19, 0
      %p86 = por %p84, %p85
      %p87 = scmp.ne.s32.totalorder %s76, %s79
      %p88 = scmp.eq.s32.totalorder %s24, 1
      %p89 = por %p87, %p88
      %p90 = scmp.ne.s32.totalorder %s79, %s80
      %p91 = scmp.eq.s32.totalorder %s24, 0
      %p92 = por %p90, %p91
      %p93 = scmp.ne.s32.totalorder %s79, %s80
      %p94 = scmp.eq.s32.totalorder %s25, 1
      %p95 = por %p93, %p94
      %p97 = scmp.ne.s32.totalorder %s80, %s96
      %p98 = scmp.eq.s32.totalorder %s25, 0
      %p99 = por %p97, %p98
      %s100 = ssub.s32 %s19, %s26
      %p101 = scmp.eq.s32.totalorder %s100, 0
      %s103 = sadd.s32 %s102, 1
      %s104 = scalar_select %p101, %s102, %s103
      %p107 = pneg %p101
      %p108 = scmp.eq.s32.totalorder %s19, 1
      %p109 = por %p107, %p108
      %p110 = scmp.ne.s32.totalorder %s102, %s105
      %p111 = scmp.eq.s32.totalorder %s19, 0
      %p112 = por %p110, %p111
      %p113 = scmp.ne.s32.totalorder %s102, %s105
      %p114 = scmp.eq.s32.totalorder %s24, 1
      %p115 = por %p113, %p114
      %p116 = scmp.ne.s32.totalorder %s105, %s106
      %p117 = scmp.eq.s32.totalorder %s24, 0
      %p118 = por %p116, %p117
      %p119 = scmp.ne.s32.totalorder %s105, %s106
      %p120 = scmp.eq.s32.totalorder %s25, 1
      %p121 = por %p119, %p120
      %p123 = scmp.ne.s32.totalorder %s106, %s122
      %p124 = scmp.eq.s32.totalorder %s25, 0
      %p125 = por %p123, %p124
      %s126 = ssub.s32 %s19, %s26
      %p127 = scmp.eq.s32.totalorder %s126, 0
      %s129 = sadd.s32 %s128, 1
      %s130 = scalar_select %p127, %s128, %s129
      %p133 = pneg %p127
      %p134 = scmp.eq.s32.totalorder %s19, 1
      %p135 = por %p133, %p134
      %p136 = scmp.ne.s32.totalorder %s128, %s131
      %p137 = scmp.eq.s32.totalorder %s19, 0
      %p138 = por %p136, %p137
      %p139 = scmp.ne.s32.totalorder %s128, %s131
      %p140 = scmp.eq.s32.totalorder %s24, 1
      %p141 = por %p139, %p140
      %p142 = scmp.ne.s32.totalorder %s131, %s132
      %p143 = scmp.eq.s32.totalorder %s24, 0
      %p144 = por %p142, %p143
      %p145 = scmp.ne.s32.totalorder %s131, %s132
      %p146 = scmp.eq.s32.totalorder %s25, 1
      %p147 = por %p145, %p146
      %p149 = scmp.ne.s32.totalorder %s132, %s148
      %p150 = scmp.eq.s32.totalorder %s25, 0
      %p151 = por %p149, %p150
      %s152 = ssub.s32 %s19, %s26
      %p153 = scmp.eq.s32.totalorder %s152, 0
      %s155 = sadd.s32 %s154, 1
      %s156 = scalar_select %p153, %s154, %s155
      %p159 = pneg %p153
      %p160 = scmp.eq.s32.totalorder %s19, 1
      %p161 = por %p159, %p160
      %p162 = scmp.ne.s32.totalorder %s154, %s157
      %p163 = scmp.eq.s32.totalorder %s19, 0
      %p164 = por %p162, %p163
      %p165 = scmp.ne.s32.totalorder %s154, %s157
      %p166 = scmp.eq.s32.totalorder %s24, 1
      %p167 = por %p165, %p166
      %p168 = scmp.ne.s32.totalorder %s157, %s158
      %p169 = scmp.eq.s32.totalorder %s24, 0
      %p170 = por %p168, %p169
      %p171 = scmp.ne.s32.totalorder %s157, %s158
      %p172 = scmp.eq.s32.totalorder %s25, 1
      %p173 = por %p171, %p172
      %p175 = scmp.ne.s32.totalorder %s158, %s174
      %p176 = scmp.eq.s32.totalorder %s25, 0
      %p177 = por %p175, %p176
      %s179 = sadd.s32 %s178, 1
      %p182 = scmp.eq.s32.totalorder %s19, 1
      %p183 = scmp.ne.s32.totalorder %s178, %s180
      %p184 = scmp.eq.s32.totalorder %s19, 0
      %p185 = por %p183, %p184
      %p186 = scmp.ne.s32.totalorder %s178, %s180
      %p187 = scmp.eq.s32.totalorder %s24, 1
      %p188 = por %p186, %p187
      %p189 = scmp.ne.s32.totalorder %s180, %s181
      %p190 = scmp.eq.s32.totalorder %s24, 0
      %p191 = por %p189, %p190
      %p192 = scmp.ne.s32.totalorder %s180, %s181
      %p193 = scmp.eq.s32.totalorder %s25, 1
      %p194 = por %p192, %p193
      %p196 = scmp.ne.s32.totalorder %s181, %s195
      %p197 = scmp.eq.s32.totalorder %s25, 0
      %p198 = por %p196, %p197
      %p199 = scmp.le.s32.totalorder 1, %s19
      %p200 = scmp.lt.s32.totalorder %s19, 3
      %p201 = pnand %p199, %p200
      %p202 = pneg %p201
      // Predicated region
      $region9: #{gpt_layers_forward.1} parent=5 // pred_check
        _
      $region10: #{gpt_layers_forward.1} parent=5 // pred_check_branch
        %204 = sbr.rel (%p201) target = $region12
      $region11: #{gpt_layers_forward.1} parent=5 // pred_region
        %s205 = ssub.s32 %s19, 1
        // Predicated region
        $region13: #{gpt_layers_forward.1} parent=11 // pred_check
          %p206 = pneg %p40
        $region14: #{gpt_layers_forward.1} parent=11 // pred_check_branch
          %208 = sbr.rel (%p206) target = $region16
        $region15: #{gpt_layers_forward.1} parent=11 // pred_region
          _
        $region16: #{gpt_layers_forward.1} parent=11 // pred_fallthru
          _
      $region12: #{gpt_layers_forward.1} parent=5 // pred_fallthru
        _
      %p209 = scmp.lt.s32.totalorder %s19, 2
      // Predicated region
      $region17: #{gpt_layers_forward.1} parent=5 // pred_check
        %p210 = pneg %p209
      $region18: #{gpt_layers_forward.1} parent=5 // pred_check_branch
        %212 = sbr.rel (%p210) target = $region20
      $region19: #{gpt_layers_forward.1} parent=5 // pred_region
        // Predicated region
        $region21: #{gpt_layers_forward.1} parent=19 // pred_check
          %p213 = pneg %p60
        $region22: #{gpt_layers_forward.1} parent=19 // pred_check_branch
          %215 = sbr.rel (%p213) target = $region24
        $region23: #{gpt_layers_forward.1} parent=19 // pred_region
          %s216 = sand.u32 %s50, 1
          %s217 = scalar_lea.sflag [#allocation5], %s216
          %s218 = sand.u32 %s50, 1
          %s219 = smul.addr %s218, 192
          %s220 = scalar_lea.vmem [#allocation4], %s219
          %s222 = ssub.s32 3072, 3072
          %223 = vsyncadd %s217, %s222
          %s224 = smul.addr %s19, 48
          %s225 = smul.addr %s224, 64
          %s226 = scalar_lea.hbm %s1, %s225
          %s227 = sshll.u32 %s220, 4
          %s228 = int_to_ptr.vmem [resolvable:$true] %s227
          %233 = dma.hbm_to_vmem [thread:$0]  %s226, 3072, %s228, %s217, 192, 192, 12
        $region24: #{gpt_layers_forward.1} parent=19 // pred_fallthru
          _
        // Predicated region
        $region25: #{gpt_layers_forward.1} parent=19 // pred_check
          %p234 = pneg %p86
        $region26: #{gpt_layers_forward.1} parent=19 // pred_check_branch
          %236 = sbr.rel (%p234) target = $region28
        $region27: #{gpt_layers_forward.1} parent=19 // pred_region
          %s237 = sand.u32 %s19, 1
          %s238 = scalar_lea.sflag [#allocation8], %s237
          %s239 = sand.u32 %s76, 1
          %s240 = smul.addr %s239, 64
          %s241 = scalar_lea.vmem [#allocation7], %s240
          %s243 = ssub.s32 1024, 1024
          %244 = vsyncadd %s238, %s243
          %s245 = smul.addr %s19, 16
          %s246 = smul.addr %s245, 64
          %s247 = scalar_lea.hbm %s2, %s246
          %s248 = sshll.u32 %s241, 4
          %s249 = int_to_ptr.vmem [resolvable:$true] %s248
          %254 = dma.hbm_to_vmem [thread:$0]  %s247, 1024, %s249, %s238, 64, 64, 4
        $region28: #{gpt_layers_forward.1} parent=19 // pred_fallthru
          _
        // Predicated region
        $region29: #{gpt_layers_forward.1} parent=19 // pred_check
          %p255 = pneg %p112
        $region30: #{gpt_layers_forward.1} parent=19 // pred_check_branch
          %257 = sbr.rel (%p255) target = $region32
        $region31: #{gpt_layers_forward.1} parent=19 // pred_region
          %p258 = scmp.lt.s32.totalorder %s19, 1
          %s259 = scalar_select %p258, %s19, 1
          %s260 = smul.addr %s259, 32
          %s261 = smul.addr %s260, 4
          %s262 = scalar_lea.vmem %s3, %s261
        $region32: #{gpt_layers_forward.1} parent=19 // pred_fallthru
          _
        // Predicated region
        $region33: #{gpt_layers_forward.1} parent=19 // pred_check
          %p263 = pneg %p138
        $region34: #{gpt_layers_forward.1} parent=19 // pred_check_branch
          %265 = sbr.rel (%p263) target = $region36
        $region35: #{gpt_layers_forward.1} parent=19 // pred_region
          %s266 = sand.u32 %s19, 1
          %s267 = scalar_lea.sflag [#allocation8], %s266
          %s268 = sand.u32 %s128, 1
          %s269 = smul.addr %s268, 128
          %s270 = scalar_lea.vmem [#allocation9], %s269
          %s272 = ssub.s32 2048, 2048
          %273 = vsyncadd %s267, %s272
          %s274 = smul.addr %s19, 32
          %s275 = smul.addr %s274, 64
          %s276 = scalar_lea.hbm %s4, %s275
          %s277 = sshll.u32 %s270, 4
          %s278 = int_to_ptr.vmem [resolvable:$true] %s277
          %283 = dma.hbm_to_vmem [thread:$0]  %s276, 2048, %s278, %s267, 64, 64, 4
        $region36: #{gpt_layers_forward.1} parent=19 // pred_fallthru
          _
        // Predicated region
        $region37: #{gpt_layers_forward.1} parent=19 // pred_check
          %p284 = pneg %p164
        $region38: #{gpt_layers_forward.1} parent=19 // pred_check_branch
          %286 = sbr.rel (%p284) target = $region40
        $region39: #{gpt_layers_forward.1} parent=19 // pred_region
          %p287 = scmp.lt.s32.totalorder %s19, 1
          %s288 = scalar_select %p287, %s19, 1
          %s289 = smul.addr %s288, 3
          %s290 = smul.addr %s289, 8
          %s291 = scalar_lea.vmem %s5, %s290
        $region40: #{gpt_layers_forward.1} parent=19 // pred_fallthru
          _
      $region20: #{gpt_layers_forward.1} parent=5 // pred_fallthru
        _
      %p292 = scmp.le.s32.totalorder 1, %s19
      %p293 = scmp.lt.s32.totalorder %s19, 3
      %p294 = pnand %p292, %p293
      %p295 = pneg %p294
      // Predicated region
      $region41: #{gpt_layers_forward.1} parent=5 // pred_check
        _
      $region42: #{gpt_layers_forward.1} parent=5 // pred_check_branch
        %297 = sbr.rel (%p294) target = $region44
      $region43: #{gpt_layers_forward.1} parent=5 // pred_region
        %s298 = ssub.s32 %s19, 1
        %s299 = sand.u32 %s53, 1
        %s300 = scalar_lea.sflag [#allocation5], %s299
        %s301 = sand.u32 %s53, 1
        %s302 = smul.addr %s301, 192
        %s303 = scalar_lea.vmem [#allocation4], %s302
        // Predicated region
        $region45: #{gpt_layers_forward.1} parent=43 // pred_check
          %p304 = pneg %p66
        $region46: #{gpt_layers_forward.1} parent=43 // pred_check_branch
          %306 = sbr.rel (%p304) target = $region48
        $region47: #{gpt_layers_forward.1} parent=43 // pred_region
          %307 = dma.done %s300, 3072
        $region48: #{gpt_layers_forward.1} parent=43 // pred_fallthru
          _
        %s308 = sand.u32 %s24, 1
        %s309 = scalar_lea.sflag [#allocation8], %s308
        %s310 = sand.u32 %s79, 1
        %s311 = smul.addr %s310, 64
        %s312 = scalar_lea.vmem [#allocation7], %s311
        // Predicated region
        $region49: #{gpt_layers_forward.1} parent=43 // pred_check
          %p313 = pneg %p92
        $region50: #{gpt_layers_forward.1} parent=43 // pred_check_branch
          %315 = sbr.rel (%p313) target = $region52
        $region51: #{gpt_layers_forward.1} parent=43 // pred_region
          %316 = dma.done %s309, 1024
        $region52: #{gpt_layers_forward.1} parent=43 // pred_fallthru
          _
        %s317 = sand.u32 %s24, 1
        %s318 = scalar_lea.sflag [#allocation8], %s317
        %s319 = sand.u32 %s131, 1
        %s320 = smul.addr %s319, 128
        %s321 = scalar_lea.vmem [#allocation9], %s320
        // Predicated region
        $region53: #{gpt_layers_forward.1} parent=43 // pred_check
          %p322 = pneg %p144
        $region54: #{gpt_layers_forward.1} parent=43 // pred_check_branch
          %324 = sbr.rel (%p322) target = $region56
        $region55: #{gpt_layers_forward.1} parent=43 // pred_region
          %325 = dma.done %s318, 2048
        $region56: #{gpt_layers_forward.1} parent=43 // pred_fallthru
          _
        %p326 = pneg %p40
        %p327 = pneg %p37
        %s328 = sand.u32 %s53, 1
        %s329 = scalar_lea.sflag [#allocation5], %s328
        %s330 = sand.u32 %s53, 1
        %s331 = smul.addr %s330, 192
        %s332 = scalar_lea.vmem [#allocation4], %s331
        %p333 = pneg %p66
        %p334 = pneg %p63
        %s335 = sand.u32 %s24, 1
        %s336 = scalar_lea.sflag [#allocation8], %s335
        %s337 = sand.u32 %s79, 1
        %s338 = smul.addr %s337, 64
        %s339 = scalar_lea.vmem [#allocation7], %s338
        %p340 = pneg %p92
        %p341 = pneg %p89
        %p342 = scmp.lt.s32.totalorder %s24, 1
        %s343 = scalar_select %p342, %s24, 1
        %s344 = smul.addr %s343, 32
        %s345 = smul.addr %s344, 4
        %s346 = scalar_lea.vmem %s3, %s345
        %p347 = pneg %p118
        %p348 = pneg %p115
        %s349 = sand.u32 %s24, 1
        %s350 = scalar_lea.sflag [#allocation8], %s349
        %s351 = sand.u32 %s131, 1
        %s352 = smul.addr %s351, 128
        %s353 = scalar_lea.vmem [#allocation9], %s352
        %p354 = pneg %p144
        %p355 = pneg %p141
        %p356 = scmp.lt.s32.totalorder %s24, 1
        %s357 = scalar_select %p356, %s24, 1
        %s358 = smul.addr %s357, 3
        %s359 = smul.addr %s358, 8
        %s360 = scalar_lea.vmem %s5, %s359
        %p361 = pneg %p170
        %p362 = pneg %p167
        %p363 = pneg %p191
        %p364 = pneg %p188
        %p365 = scmp.lt.s32.totalorder %s24, 1
        %s366 = scalar_select %p365, %s24, 1
        %s367 = smul.addr %s366, 32
        %s368 = smul.addr %s367, 4
        %s369 = scalar_lea.vmem %s3, %s368
        %p370 = scmp.lt.s32.totalorder %s24, 1
        %s371 = scalar_select %p370, %s24, 1
        %s372 = smul.addr %s371, 3
        %s373 = smul.addr %s372, 8
        %s374 = scalar_lea.vmem %s5, %s373
        %p376 = scmp.eq.s32.totalorder %s24, 0
        // Predicated region
        $region57: #{gpt_layers_forward.1} parent=43 // pred_check
          %p377 = pneg %p376
        $region58: #{gpt_layers_forward.1} parent=43 // pred_check_branch
          %379 = sbr.rel (%p377) target = $region60
        $region59: #{gpt_layers_forward.1} parent=43 // pred_region
          %v380 = vld [vmem:[%s0] sm:$0xff]
          %v381 = vld [vmem:[%s0 + $0x8] sm:$0xff]
          %382 = vst [vmem:[#allocation2] sm:$0xff] %v380
          %383 = vst [vmem:[#allocation2 + $0x8] sm:$0xff] %v381
          %v384 = vlaneseq
          %v385 = vshrl.u32 %v384, 7
          %v386 = vlaneseq
          %v387 = vand.u32 %v386, 127
          %vm388 = vcmp.le.s32.totalorder %v387, %v385
          %v389 = vsel %vm388, 0.0, -1e+30
          %vm390 = vcmask 64512
          %391 = vst.msk [vmem:[#allocation3] sm:$0xff] %vm390, %v389
        $region60: #{gpt_layers_forward.1} parent=43 // pred_fallthru
          _
        %v392 = vld [vmem:[#allocation2] sm:$0xff]
        %v393 = vld [vmem:[#allocation2 + $0x8] sm:$0xff]
        %v394 = vpack.c.bf16 %v393, %v392
        %v395 = vld [vmem:[%s374] sm:$0x3f]
        %v396 = vld [vmem:[%s374 + $0x8] sm:$0x3f]
        %v397 = vld [vmem:[%s374 + $0x10] sm:$0x3f]
        %v398 = vld [vmem:[%s303] sm:$0xff]
        %v399 = vld [vmem:[%s303 + $0x8] sm:$0xf]
        %v400 = vld [vmem:[%s303 + $0xc] sm:$0xff]
        %v401 = vld [vmem:[%s303 + $0x14] sm:$0xf]
        %v402 = vld [vmem:[%s303 + $0x18] sm:$0xff]
        %v403 = vld [vmem:[%s303 + $0x20] sm:$0xf]
        %v404 = vld [vmem:[%s303 + $0x24] sm:$0xff]
        %v405 = vld [vmem:[%s303 + $0x2c] sm:$0xf]
        %v406 = vld [vmem:[%s303 + $0x30] sm:$0xff]
        %v407 = vld [vmem:[%s303 + $0x38] sm:$0xf]
        %v408 = vld [vmem:[%s303 + $0x3c] sm:$0xff]
        %v409 = vld [vmem:[%s303 + $0x44] sm:$0xf]
        %v410 = vld [vmem:[%s303 + $0x48] sm:$0xff]
        %v411 = vld [vmem:[%s303 + $0x50] sm:$0xf]
        %v412 = vld [vmem:[%s303 + $0x54] sm:$0xff]
        %v413 = vld [vmem:[%s303 + $0x5c] sm:$0xf]
        %v414 = vld [vmem:[%s303 + $0x60] sm:$0xff]
        %v415 = vld [vmem:[%s303 + $0x68] sm:$0xf]
        %v416 = vld [vmem:[%s303 + $0x6c] sm:$0xff]
        %v417 = vld [vmem:[%s303 + $0x74] sm:$0xf]
        %v418 = vld [vmem:[%s303 + $0x78] sm:$0xff]
        %v419 = vld [vmem:[%s303 + $0x80] sm:$0xf]
        %v420 = vld [vmem:[%s303 + $0x84] sm:$0xff]
        %v421 = vld [vmem:[%s303 + $0x8c] sm:$0xf]
        %v422 = vld [vmem:[%s303 + $0x90] sm:$0xff]
        %v423 = vld [vmem:[%s303 + $0x98] sm:$0xf]
        %v424 = vld [vmem:[%s303 + $0x9c] sm:$0xff]
        %v425 = vld [vmem:[%s303 + $0xa4] sm:$0xf]
        %v426 = vld [vmem:[%s303 + $0xa8] sm:$0xff]
        %v427 = vld [vmem:[%s303 + $0xb0] sm:$0xf]
        %v428 = vld [vmem:[%s303 + $0xb4] sm:$0xff]
        %v429 = vld [vmem:[%s303 + $0xbc] sm:$0xf]
        %v430 = vlaneseq
        %v431 = vshrl.u32 %v430, 7
        %v432 = vsub.s32 0, %v431
        %v433 = vrot.slane %v395, %v432
        %v434 = vlaneseq
        %v435 = vshrl.u32 %v434, 7
        %v436 = vsub.s32 0, %v435
        %v437 = vrot.slane %v396, %v436
        %v438 = vlaneseq
        %v439 = vshrl.u32 %v438, 7
        %v440 = vsub.s32 0, %v439
        %v441 = vrot.slane %v397, %v440
        %v474 = vunpack.c.l.b16 %v398
        %v475 = vunpack.c.h.b16 %v398
        %v476 = vunpack.c.l.b16 %v399
        %v477 = vunpack.c.l.b16 %v400
        %v478 = vunpack.c.h.b16 %v400
        %v479 = vunpack.c.l.b16 %v401
        %v480 = vunpack.c.l.b16 %v402
        %v481 = vunpack.c.h.b16 %v402
        %v482 = vunpack.c.l.b16 %v403
        %v483 = vunpack.c.l.b16 %v404
        %v484 = vunpack.c.h.b16 %v404
        %v485 = vunpack.c.l.b16 %v405
        %v486 = vunpack.c.l.b16 %v406
        %v487 = vunpack.c.h.b16 %v406
        %v488 = vunpack.c.l.b16 %v407
        %v489 = vunpack.c.l.b16 %v408
        %v490 = vunpack.c.h.b16 %v408
        %v491 = vunpack.c.l.b16 %v409
        %v492 = vunpack.c.l.b16 %v410
        %v493 = vunpack.c.h.b16 %v410
        %v494 = vunpack.c.l.b16 %v411
        %v495 = vunpack.c.l.b16 %v412
        %v496 = vunpack.c.h.b16 %v412
        %v497 = vunpack.c.l.b16 %v413
        %v498 = vunpack.c.l.b16 %v414
        %v499 = vunpack.c.h.b16 %v414
        %v500 = vunpack.c.l.b16 %v415
        %v501 = vunpack.c.l.b16 %v416
        %v502 = vunpack.c.h.b16 %v416
        %v503 = vunpack.c.l.b16 %v417
        %v504 = vunpack.c.l.b16 %v418
        %v505 = vunpack.c.h.b16 %v418
        %v506 = vunpack.c.l.b16 %v419
        %v507 = vunpack.c.l.b16 %v420
        %v508 = vunpack.c.h.b16 %v420
        %v509 = vunpack.c.l.b16 %v421
        %v510 = vunpack.c.l.b16 %v422
        %v511 = vunpack.c.h.b16 %v422
        %v512 = vunpack.c.l.b16 %v423
        %v513 = vunpack.c.l.b16 %v424
        %v514 = vunpack.c.h.b16 %v424
        %v515 = vunpack.c.l.b16 %v425
        %v516 = vunpack.c.l.b16 %v426
        %v517 = vunpack.c.h.b16 %v426
        %v518 = vunpack.c.l.b16 %v427
        %v519 = vunpack.c.l.b16 %v428
        %v520 = vunpack.c.h.b16 %v428
        %v521 = vunpack.c.l.b16 %v429
        %v522 = vpack.c.b16 %v477, %v474
        %v523 = vpack.c.b16 %v478, %v475
        %v524 = vpack.c.b16 %v479, %v476
        %v525 = vpack.c.b16 %v483, %v480
        %v526 = vpack.c.b16 %v484, %v481
        %v527 = vpack.c.b16 %v485, %v482
        %v528 = vpack.c.b16 %v489, %v486
        %v529 = vpack.c.b16 %v490, %v487
        %v530 = vpack.c.b16 %v491, %v488
        %v531 = vpack.c.b16 %v495, %v492
        %v532 = vpack.c.b16 %v496, %v493
        %v533 = vpack.c.b16 %v497, %v494
        %v534 = vpack.c.b16 %v501, %v498
        %v535 = vpack.c.b16 %v502, %v499
        %v536 = vpack.c.b16 %v503, %v500
        %v537 = vpack.c.b16 %v507, %v504
        %v538 = vpack.c.b16 %v508, %v505
        %v539 = vpack.c.b16 %v509, %v506
        %v540 = vpack.c.b16 %v513, %v510
        %v541 = vpack.c.b16 %v514, %v511
        %v542 = vpack.c.b16 %v515, %v512
        %v543 = vpack.c.b16 %v519, %v516
        %v544 = vpack.c.b16 %v520, %v517
        %v545 = vpack.c.b16 %v521, %v518
        %570 = vmatprep.subr.bf16.mxu0 %v544
        %571 = vmatpush1.bf16.msra.mxu0 %v543
        %572 = vmatprep.subr.bf16.mxu0 %v541
        %573 = vmatpush1.bf16.msra.mxu0 %v540
        %574 = vmatprep.subr.bf16.mxu0 %v538
        %575 = vmatpush1.bf16.msra.mxu0 %v537
        %576 = vmatprep.subr.bf16.mxu0 %v535
        %577 = vmatpush1.bf16.msra.mxu0 %v534
        %578 = vmatprep.subr.bf16.mxu0 %v532
        %579 = vmatpush1.bf16.msra.mxu0 %v531
        %580 = vmatprep.subr.bf16.mxu0 %v529
        %581 = vmatpush1.bf16.msra.mxu0 %v528
        %582 = vmatprep.subr.bf16.mxu0 %v526
        %583 = vmatpush1.bf16.msra.mxu0 %v525
        %584 = vmatprep.subr.bf16.mxu0 %v523
        %585 = vmatpush1.bf16.msra.mxu0 %v522
        %586 = vmatprep.subr.bf16.mxu0 0
        %587 = vmatpush2.bf16.msra.mxu0 0
        %588 = vmatprep.subr.bf16.mxu0 0
        %589 = vmatpush2.bf16.msra.mxu0 0
        %590 = vmatprep.subr.bf16.mxu0 0
        %591 = vmatpush2.bf16.msra.mxu0 0
        %592 = vmatprep.subr.bf16.mxu0 0
        %593 = vmatpush2.bf16.msra.mxu0 0
        %594 = vmatprep.subr.bf16.mxu0 0
        %595 = vmatpush2.bf16.msra.mxu0 0
        %596 = vmatprep.subr.bf16.mxu0 0
        %597 = vmatpush2.bf16.msra.mxu0 0
        %598 = vmatprep.subr.bf16.mxu0 0
        %599 = vmatpush2.bf16.msra.mxu0 0
        %600 = vmatprep.subr.bf16.mxu0 0
        %601 = vmatpush2.bf16.msra.mxu0 0
        %602 = vmatprep.mubr.bf16.mxu0 0
        %603 = vmatmul.mubr.bf16.gmra.mxu0 %v394
        %v604 = vpop.f32.mrf.mxu0
        %v605 = vadd.f32 %v433, %v604
        %v606 = vpop.f32.mrf.mxu0
        %v607 = vadd.f32 %v437, %v606
        %v608 = vpop.f32.mrf.mxu0
        %v609 = vadd.f32 %v433, %v608
        %v610 = vpop.f32.mrf.mxu0
        %v611 = vadd.f32 %v437, %v610
        %612 = vdwg.mxu0
        %613 = vmatprep.subr.bf16.mxu0 0
        %614 = vmatpush1.bf16.msra.mxu0 %v545
        %615 = vmatprep.subr.bf16.mxu0 0
        %616 = vmatpush1.bf16.msra.mxu0 %v542
        %617 = vmatprep.subr.bf16.mxu0 0
        %618 = vmatpush1.bf16.msra.mxu0 %v539
        %619 = vmatprep.subr.bf16.mxu0 0
        %620 = vmatpush1.bf16.msra.mxu0 %v536
        %621 = vmatprep.subr.bf16.mxu0 0
        %622 = vmatpush1.bf16.msra.mxu0 %v533
        %623 = vmatprep.subr.bf16.mxu0 0
        %624 = vmatpush1.bf16.msra.mxu0 %v530
        %625 = vmatprep.subr.bf16.mxu0 0
        %626 = vmatpush1.bf16.msra.mxu0 %v527
        %627 = vmatprep.subr.bf16.mxu0 0
        %628 = vmatpush1.bf16.msra.mxu0 %v524
        %629 = vmatprep.subr.bf16.mxu0 0
        %630 = vmatpush2.bf16.msra.mxu0 0
        %631 = vmatprep.subr.bf16.mxu0 0
        %632 = vmatpush2.bf16.msra.mxu0 0
        %633 = vmatprep.subr.bf16.mxu0 0
        %634 = vmatpush2.bf16.msra.mxu0 0
        %635 = vmatprep.subr.bf16.mxu0 0
        %636 = vmatpush2.bf16.msra.mxu0 0
        %637 = vmatprep.subr.bf16.mxu0 0
        %638 = vmatpush2.bf16.msra.mxu0 0
        %639 = vmatprep.subr.bf16.mxu0 0
        %640 = vmatpush2.bf16.msra.mxu0 0
        %641 = vmatprep.subr.bf16.mxu0 0
        %642 = vmatpush2.bf16.msra.mxu0 0
        %643 = vmatprep.subr.bf16.mxu0 0
        %644 = vmatpush2.bf16.msra.mxu0 0
        %645 = vmatprep.mubr.bf16.mxu0 0
        %646 = vmatmul.mubr.bf16.gmra.mxu0 %v394
        %v647 = vpop.f32.mrf.mxu0
        %v648 = vadd.f32 %v441, %v647
        %v649 = vpop.f32.mrf.mxu0
        %v650 = vpop.f32.mrf.mxu0
        %v651 = vadd.f32 %v441, %v650
        %v652 = vpop.f32.mrf.mxu0
        %653 = vdwg.mxu0
        %v654 = vpack.c.bf16 %v609, %v605
        %v655 = vpack.c.bf16 %v611, %v607
        %v656 = vpack.c.bf16 %v651, %v648
        %v658 = vunpack.c.l.b16 %v654
        %v659 = vunpack.c.h.b16 %v654
        %v660 = vpack.c.b16 %v658, %v658
        %v661 = vpack.c.b16 %v659, %v659
        %v663 = vunpack.c.l.b16 %v655
        %v664 = vunpack.c.h.b16 %v655
        %v665 = vpack.c.b16 %v663, %v663
        %v666 = vpack.c.b16 %v664, %v664
        %v668 = vunpack.c.l.b16 %v656
        %v669 = vunpack.c.h.b16 %v656
        %v670 = vpack.c.b16 %v668, %v668
        %v671 = vpack.c.b16 %v669, %v669
        %v672 = vld [vmem:[#allocation3] sm:$0xff]
        %vm673 = vcmask 261120
        %v675 = vsel %vm673, %v660, 0
        %v678 = vsel %vm673, %v665, 0
        %680 = vmatprep.subr.bf16.mxu0 0
        %681 = vmatpush1.bf16.xpose.msra.mxu0 0
        %682 = vmatprep.subr.bf16.mxu0 0
        %683 = vmatpush1.bf16.xpose.msra.mxu0 0
        %684 = vmatprep.subr.bf16.mxu0 0
        %685 = vmatpush1.bf16.xpose.msra.mxu0 0
        %686 = vmatprep.subr.bf16.mxu0 0
        %687 = vmatpush1.bf16.xpose.msra.mxu0 0
        %688 = vmatprep.subr.bf16.mxu0 0
        %689 = vmatpush1.bf16.xpose.msra.mxu0 0
        %690 = vmatprep.subr.bf16.mxu0 0
        %691 = vmatpush1.bf16.xpose.msra.mxu0 0
        %692 = vmatprep.subr.bf16.mxu0 0
        %693 = vmatpush1.bf16.xpose.msra.mxu0 0
        %694 = vmatprep.subr.bf16.mxu0 0
        %695 = vmatpush1.bf16.xpose.msra.mxu0 %v678
        %696 = vmatprep.subr.bf16.mxu0 0
        %697 = vmatpush2.bf16.xpose.msra.mxu0 0
        %698 = vmatprep.subr.bf16.mxu0 0
        %699 = vmatpush2.bf16.xpose.msra.mxu0 0
        %700 = vmatprep.subr.bf16.mxu0 0
        %701 = vmatpush2.bf16.xpose.msra.mxu0 0
        %702 = vmatprep.subr.bf16.mxu0 0
        %703 = vmatpush2.bf16.xpose.msra.mxu0 0
        %704 = vmatprep.subr.bf16.mxu0 0
        %705 = vmatpush2.bf16.xpose.msra.mxu0 0
        %706 = vmatprep.subr.bf16.mxu0 0
        %707 = vmatpush2.bf16.xpose.msra.mxu0 0
        %708 = vmatprep.subr.bf16.mxu0 0
        %709 = vmatpush2.bf16.xpose.msra.mxu0 0
        %710 = vmatprep.subr.bf16.mxu0 0
        %711 = vmatpush2.bf16.xpose.msra.mxu0 0
        %712 = vmatprep.mubr.bf16.mxu0 0
        %713 = vmatmul.mubr.bf16.gmra.mxu0 %v675
        %v714 = vpop.f32.mrf.mxu0
        %v715 = vadd.f32 %v672, %v714
        %v716 = vpop.f32.mrf.mxu0
        %v717 = vpop.f32.mrf.mxu0
        %v718 = vpop.f32.mrf.mxu0
        %719 = vdwg.mxu0
        %v721 = vsel %vm673, %v661, 0
        %v724 = vsel %vm673, %v666, 0
        %726 = vmatprep.subr.bf16.mxu0 0
        %727 = vmatpush1.bf16.xpose.msra.mxu0 0
        %728 = vmatprep.subr.bf16.mxu0 0
        %729 = vmatpush1.bf16.xpose.msra.mxu0 0
        %730 = vmatprep.subr.bf16.mxu0 0
        %731 = vmatpush1.bf16.xpose.msra.mxu0 0
        %732 = vmatprep.subr.bf16.mxu0 0
        %733 = vmatpush1.bf16.xpose.msra.mxu0 0
        %734 = vmatprep.subr.bf16.mxu0 0
        %735 = vmatpush1.bf16.xpose.msra.mxu0 0
        %736 = vmatprep.subr.bf16.mxu0 0
        %737 = vmatpush1.bf16.xpose.msra.mxu0 0
        %738 = vmatprep.subr.bf16.mxu0 0
        %739 = vmatpush1.bf16.xpose.msra.mxu0 0
        %740 = vmatprep.subr.bf16.mxu0 0
        %741 = vmatpush1.bf16.xpose.msra.mxu0 %v724
        %742 = vmatprep.subr.bf16.mxu0 0
        %743 = vmatpush2.bf16.xpose.msra.mxu0 0
        %744 = vmatprep.subr.bf16.mxu0 0
        %745 = vmatpush2.bf16.xpose.msra.mxu0 0
        %746 = vmatprep.subr.bf16.mxu0 0
        %747 = vmatpush2.bf16.xpose.msra.mxu0 0
        %748 = vmatprep.subr.bf16.mxu0 0
        %749 = vmatpush2.bf16.xpose.msra.mxu0 0
        %750 = vmatprep.subr.bf16.mxu0 0
        %751 = vmatpush2.bf16.xpose.msra.mxu0 0
        %752 = vmatprep.subr.bf16.mxu0 0
        %753 = vmatpush2.bf16.xpose.msra.mxu0 0
        %754 = vmatprep.subr.bf16.mxu0 0
        %755 = vmatpush2.bf16.xpose.msra.mxu0 0
        %756 = vmatprep.subr.bf16.mxu0 0
        %757 = vmatpush2.bf16.xpose.msra.mxu0 0
        %758 = vmatprep.mubr.bf16.mxu0 0
        %759 = vmatmul.mubr.bf16.gmra.mxu0 %v721
        %v760 = vpop.f32.mrf.mxu0
        %v761 = vadd.f32 %v672, %v760
        %v762 = vpop.f32.mrf.mxu0
        %v763 = vpop.f32.mrf.mxu0
        %v764 = vpop.f32.mrf.mxu0
        %765 = vdwg.mxu0
        %vm766 = vcmask 64512
        %v767 = vsel %vm766, %v715, -inf
        %768 = vmax.xlane.f32.xlu0 %v767
        %v769 = vpop.xlane.xlu0 %768
        %v770 = vsel %vm766, %v761, -inf
        %771 = vmax.xlane.f32.xlu0 %v770
        %v772 = vpop.xlane.xlu0 %771
        %v773 = vsub.f32 %v715, %v769
        %v774 = vsub.f32 %v761, %v772
        %v775 = vmul.f32 %v773, 1.442695
        %v776 = vpow.pop %v775
        %v777 = vmul.f32 %v774, 1.442695
        %v778 = vpow.pop %v777
        %v779 = vsel %vm766, %v776, 0.0
        %780 = vadd.xlane.f32.xlu0 %v779
        %v781 = vpop.xlane.xlu0 %780
        %v782 = vsel %vm766, %v778, 0.0
        %783 = vadd.xlane.f32.xlu0 %v782
        %v784 = vpop.xlane.xlu0 %783
        %v785 = vrcp.pop %v781
        %v786 = vrcp.pop %v784
        %v787 = vmul.f32 %v776, %v785
        %v788 = vmul.f32 %v778, %v786
        %v789 = vpack.c.bf16 %v787, %v787
        %v790 = vpack.c.bf16 %v788, %v788
        %v792 = vsel %vm766, %v789, 0
        %vm794 = vcmask 1043456
        %v796 = vsel %vm794, %v670, 0
        %798 = vmatprep.subr.bf16.mxu0 0
        %799 = vmatpush1.bf16.msra.mxu0 0
        %800 = vmatprep.subr.bf16.mxu0 0
        %801 = vmatpush1.bf16.msra.mxu0 0
        %802 = vmatprep.subr.bf16.mxu0 0
        %803 = vmatpush1.bf16.msra.mxu0 0
        %804 = vmatprep.subr.bf16.mxu0 0
        %805 = vmatpush1.bf16.msra.mxu0 0
        %806 = vmatprep.subr.bf16.mxu0 0
        %807 = vmatpush1.bf16.msra.mxu0 0
        %808 = vmatprep.subr.bf16.mxu0 0
        %809 = vmatpush1.bf16.msra.mxu0 0
        %810 = vmatprep.subr.bf16.mxu0 0
        %811 = vmatpush1.bf16.msra.mxu0 0
        %812 = vmatprep.subr.bf16.mxu0 0
        %813 = vmatpush1.bf16.msra.mxu0 %v796
        %814 = vmatprep.subr.bf16.mxu0 0
        %815 = vmatpush2.bf16.msra.mxu0 0
        %816 = vmatprep.subr.bf16.mxu0 0
        %817 = vmatpush2.bf16.msra.mxu0 0
        %818 = vmatprep.subr.bf16.mxu0 0
        %819 = vmatpush2.bf16.msra.mxu0 0
        %820 = vmatprep.subr.bf16.mxu0 0
        %821 = vmatpush2.bf16.msra.mxu0 0
        %822 = vmatprep.subr.bf16.mxu0 0
        %823 = vmatpush2.bf16.msra.mxu0 0
        %824 = vmatprep.subr.bf16.mxu0 0
        %825 = vmatpush2.bf16.msra.mxu0 0
        %826 = vmatprep.subr.bf16.mxu0 0
        %827 = vmatpush2.bf16.msra.mxu0 0
        %828 = vmatprep.subr.bf16.mxu0 0
        %829 = vmatpush2.bf16.msra.mxu0 0
        %830 = vmatprep.mubr.bf16.mxu0 0
        %831 = vmatmul.mubr.bf16.gmra.mxu0 %v792
        %v832 = vpop.f32.mrf.mxu0
        %v833 = vadd.f32 0.0, %v832
        %v834 = vpop.f32.mrf.mxu0
        %v835 = vpop.f32.mrf.mxu0
        %v836 = vpop.f32.mrf.mxu0
        %837 = vdwg.mxu0
        %v839 = vsel %vm766, %v790, 0
        %v842 = vsel %vm794, %v671, 0
        %844 = vmatprep.subr.bf16.mxu0 0
        %845 = vmatpush1.bf16.msra.mxu0 0
        %846 = vmatprep.subr.bf16.mxu0 0
        %847 = vmatpush1.bf16.msra.mxu0 0
        %848 = vmatprep.subr.bf16.mxu0 0
        %849 = vmatpush1.bf16.msra.mxu0 0
        %850 = vmatprep.subr.bf16.mxu0 0
        %851 = vmatpush1.bf16.msra.mxu0 0
        %852 = vmatprep.subr.bf16.mxu0 0
        %853 = vmatpush1.bf16.msra.mxu0 0
        %854 = vmatprep.subr.bf16.mxu0 0
        %855 = vmatpush1.bf16.msra.mxu0 0
        %856 = vmatprep.subr.bf16.mxu0 0
        %857 = vmatpush1.bf16.msra.mxu0 0
        %858 = vmatprep.subr.bf16.mxu0 0
        %859 = vmatpush1.bf16.msra.mxu0 %v842
        %860 = vmatprep.subr.bf16.mxu0 0
        %861 = vmatpush2.bf16.msra.mxu0 0
        %862 = vmatprep.subr.bf16.mxu0 0
        %863 = vmatpush2.bf16.msra.mxu0 0
        %864 = vmatprep.subr.bf16.mxu0 0
        %865 = vmatpush2.bf16.msra.mxu0 0
        %866 = vmatprep.subr.bf16.mxu0 0
        %867 = vmatpush2.bf16.msra.mxu0 0
        %868 = vmatprep.subr.bf16.mxu0 0
        %869 = vmatpush2.bf16.msra.mxu0 0
        %870 = vmatprep.subr.bf16.mxu0 0
        %871 = vmatpush2.bf16.msra.mxu0 0
        %872 = vmatprep.subr.bf16.mxu0 0
        %873 = vmatpush2.bf16.msra.mxu0 0
        %874 = vmatprep.subr.bf16.mxu0 0
        %875 = vmatpush2.bf16.msra.mxu0 0
        %876 = vmatprep.mubr.bf16.mxu0 0
        %877 = vmatmul.mubr.bf16.gmra.mxu0 %v839
        %v878 = vpop.f32.mrf.mxu0
        %v879 = vadd.f32 0.0, %v878
        %v880 = vpop.f32.mrf.mxu0
        %v881 = vpop.f32.mrf.mxu0
        %v882 = vpop.f32.mrf.mxu0
        %883 = vdwg.mxu0
        %884 = vrot.lane.b32.xlu0 %v660, 96
        %v885 = vpop.permute.xlu0 %884
        %886 = vrot.lane.b32.xlu0 %v665, 96
        %v887 = vpop.permute.xlu0 %886
        %v889 = vsel %vm673, %v885, 0
        %v892 = vsel %vm673, %v887, 0
        %894 = vmatprep.subr.bf16.mxu0 0
        %895 = vmatpush1.bf16.xpose.msra.mxu0 0
        %896 = vmatprep.subr.bf16.mxu0 0
        %897 = vmatpush1.bf16.xpose.msra.mxu0 0
        %898 = vmatprep.subr.bf16.mxu0 0
        %899 = vmatpush1.bf16.xpose.msra.mxu0 0
        %900 = vmatprep.subr.bf16.mxu0 0
        %901 = vmatpush1.bf16.xpose.msra.mxu0 0
        %902 = vmatprep.subr.bf16.mxu0 0
        %903 = vmatpush1.bf16.xpose.msra.mxu0 0
        %904 = vmatprep.subr.bf16.mxu0 0
        %905 = vmatpush1.bf16.xpose.msra.mxu0 0
        %906 = vmatprep.subr.bf16.mxu0 0
        %907 = vmatpush1.bf16.xpose.msra.mxu0 0
        %908 = vmatprep.subr.bf16.mxu0 0
        %909 = vmatpush1.bf16.xpose.msra.mxu0 %v892
        %910 = vmatprep.subr.bf16.mxu0 0
        %911 = vmatpush2.bf16.xpose.msra.mxu0 0
        %912 = vmatprep.subr.bf16.mxu0 0
        %913 = vmatpush2.bf16.xpose.msra.mxu0 0
        %914 = vmatprep.subr.bf16.mxu0 0
        %915 = vmatpush2.bf16.xpose.msra.mxu0 0
        %916 = vmatprep.subr.bf16.mxu0 0
        %917 = vmatpush2.bf16.xpose.msra.mxu0 0
        %918 = vmatprep.subr.bf16.mxu0 0
        %919 = vmatpush2.bf16.xpose.msra.mxu0 0
        %920 = vmatprep.subr.bf16.mxu0 0
        %921 = vmatpush2.bf16.xpose.msra.mxu0 0
        %922 = vmatprep.subr.bf16.mxu0 0
        %923 = vmatpush2.bf16.xpose.msra.mxu0 0
        %924 = vmatprep.subr.bf16.mxu0 0
        %925 = vmatpush2.bf16.xpose.msra.mxu0 0
        %926 = vmatprep.mubr.bf16.mxu0 0
        %927 = vmatmul.mubr.bf16.gmra.mxu0 %v889
        %v928 = vpop.f32.mrf.mxu0
        %v929 = vadd.f32 %v672, %v928
        %v930 = vpop.f32.mrf.mxu0
        %v931 = vpop.f32.mrf.mxu0
        %v932 = vpop.f32.mrf.mxu0
        %933 = vdwg.mxu0
        %934 = vrot.lane.b32.xlu0 %v661, 96
        %v935 = vpop.permute.xlu0 %934
        %936 = vrot.lane.b32.xlu0 %v666, 96
        %v937 = vpop.permute.xlu0 %936
        %v939 = vsel %vm673, %v935, 0
        %v942 = vsel %vm673, %v937, 0
        %944 = vmatprep.subr.bf16.mxu0 0
        %945 = vmatpush1.bf16.xpose.msra.mxu0 0
        %946 = vmatprep.subr.bf16.mxu0 0
        %947 = vmatpush1.bf16.xpose.msra.mxu0 0
        %948 = vmatprep.subr.bf16.mxu0 0
        %949 = vmatpush1.bf16.xpose.msra.mxu0 0
        %950 = vmatprep.subr.bf16.mxu0 0
        %951 = vmatpush1.bf16.xpose.msra.mxu0 0
        %952 = vmatprep.subr.bf16.mxu0 0
        %953 = vmatpush1.bf16.xpose.msra.mxu0 0
        %954 = vmatprep.subr.bf16.mxu0 0
        %955 = vmatpush1.bf16.xpose.msra.mxu0 0
        %956 = vmatprep.subr.bf16.mxu0 0
        %957 = vmatpush1.bf16.xpose.msra.mxu0 0
        %958 = vmatprep.subr.bf16.mxu0 0
        %959 = vmatpush1.bf16.xpose.msra.mxu0 %v942
        %960 = vmatprep.subr.bf16.mxu0 0
        %961 = vmatpush2.bf16.xpose.msra.mxu0 0
        %962 = vmatprep.subr.bf16.mxu0 0
        %963 = vmatpush2.bf16.xpose.msra.mxu0 0
        %964 = vmatprep.subr.bf16.mxu0 0
        %965 = vmatpush2.bf16.xpose.msra.mxu0 0
        %966 = vmatprep.subr.bf16.mxu0 0
        %967 = vmatpush2.bf16.xpose.msra.mxu0 0
        %968 = vmatprep.subr.bf16.mxu0 0
        %969 = vmatpush2.bf16.xpose.msra.mxu0 0
        %970 = vmatprep.subr.bf16.mxu0 0
        %971 = vmatpush2.bf16.xpose.msra.mxu0 0
        %972 = vmatprep.subr.bf16.mxu0 0
        %973 = vmatpush2.bf16.xpose.msra.mxu0 0
        %974 = vmatprep.subr.bf16.mxu0 0
        %975 = vmatpush2.bf16.xpose.msra.mxu0 0
        %976 = vmatprep.mubr.bf16.mxu0 0
        %977 = vmatmul.mubr.bf16.gmra.mxu0 %v939
        %v978 = vpop.f32.mrf.mxu0
        %v979 = vadd.f32 %v672, %v978
        %v980 = vpop.f32.mrf.mxu0
        %v981 = vpop.f32.mrf.mxu0
        %v982 = vpop.f32.mrf.mxu0
        %983 = vdwg.mxu0
        %v984 = vsel %vm766, %v929, -inf
        %985 = vmax.xlane.f32.xlu0 %v984
        %v986 = vpop.xlane.xlu0 %985
        %v987 = vsel %vm766, %v979, -inf
        %988 = vmax.xlane.f32.xlu0 %v987
        %v989 = vpop.xlane.xlu0 %988
        %v990 = vsub.f32 %v929, %v986
        %v991 = vsub.f32 %v979, %v989
        %v992 = vmul.f32 %v990, 1.442695
        %v993 = vpow.pop %v992
        %v994 = vmul.f32 %v991, 1.442695
        %v995 = vpow.pop %v994
        %v996 = vsel %vm766, %v993, 0.0
        %997 = vadd.xlane.f32.xlu0 %v996
        %v998 = vpop.xlane.xlu0 %997
        %v999 = vsel %vm766, %v995, 0.0
        %1000 = vadd.xlane.f32.xlu0 %v999
        %v1001 = vpop.xlane.xlu0 %1000
        %v1002 = vrcp.pop %v998
        %v1003 = vrcp.pop %v1001
        %v1004 = vmul.f32 %v993, %v1002
        %v1005 = vmul.f32 %v995, %v1003
        %v1006 = vpack.c.bf16 %v1004, %v1004
        %v1007 = vpack.c.bf16 %v1005, %v1005
        %1008 = vrot.lane.b32.xlu0 %v670, 96
        %v1009 = vpop.permute.xlu0 %1008
        %v1011 = vsel %vm766, %v1006, 0
        %v1014 = vsel %vm794, %v1009, 0
        %1016 = vmatprep.subr.bf16.mxu0 0
        %1017 = vmatpush1.bf16.msra.mxu0 0
        %1018 = vmatprep.subr.bf16.mxu0 0
        %1019 = vmatpush1.bf16.msra.mxu0 0
        %1020 = vmatprep.subr.bf16.mxu0 0
        %1021 = vmatpush1.bf16.msra.mxu0 0
        %1022 = vmatprep.subr.bf16.mxu0 0
        %1023 = vmatpush1.bf16.msra.mxu0 0
        %1024 = vmatprep.subr.bf16.mxu0 0
        %1025 = vmatpush1.bf16.msra.mxu0 0
        %1026 = vmatprep.subr.bf16.mxu0 0
        %1027 = vmatpush1.bf16.msra.mxu0 0
        %1028 = vmatprep.subr.bf16.mxu0 0
        %1029 = vmatpush1.bf16.msra.mxu0 0
        %1030 = vmatprep.subr.bf16.mxu0 0
        %1031 = vmatpush1.bf16.msra.mxu0 %v1014
        %1032 = vmatprep.subr.bf16.mxu0 0
        %1033 = vmatpush2.bf16.msra.mxu0 0
        %1034 = vmatprep.subr.bf16.mxu0 0
        %1035 = vmatpush2.bf16.msra.mxu0 0
        %1036 = vmatprep.subr.bf16.mxu0 0
        %1037 = vmatpush2.bf16.msra.mxu0 0
        %1038 = vmatprep.subr.bf16.mxu0 0
        %1039 = vmatpush2.bf16.msra.mxu0 0
        %1040 = vmatprep.subr.bf16.mxu0 0
        %1041 = vmatpush2.bf16.msra.mxu0 0
        %1042 = vmatprep.subr.bf16.mxu0 0
        %1043 = vmatpush2.bf16.msra.mxu0 0
        %1044 = vmatprep.subr.bf16.mxu0 0
        %1045 = vmatpush2.bf16.msra.mxu0 0
        %1046 = vmatprep.subr.bf16.mxu0 0
        %1047 = vmatpush2.bf16.msra.mxu0 0
        %1048 = vmatprep.mubr.bf16.mxu0 0
        %1049 = vmatmul.mubr.bf16.gmra.mxu0 %v1011
        %v1050 = vpop.f32.mrf.mxu0
        %v1051 = vadd.f32 0.0, %v1050
        %v1052 = vpop.f32.mrf.mxu0
        %v1053 = vpop.f32.mrf.mxu0
        %v1054 = vpop.f32.mrf.mxu0
        %1055 = vdwg.mxu0
        %1056 = vrot.lane.b32.xlu0 %v671, 96
        %v1057 = vpop.permute.xlu0 %1056
        %v1059 = vsel %vm766, %v1007, 0
        %v1062 = vsel %vm794, %v1057, 0
        %1064 = vmatprep.subr.bf16.mxu0 0
        %1065 = vmatpush1.bf16.msra.mxu0 0
        %1066 = vmatprep.subr.bf16.mxu0 0
        %1067 = vmatpush1.bf16.msra.mxu0 0
        %1068 = vmatprep.subr.bf16.mxu0 0
        %1069 = vmatpush1.bf16.msra.mxu0 0
        %1070 = vmatprep.subr.bf16.mxu0 0
        %1071 = vmatpush1.bf16.msra.mxu0 0
        %1072 = vmatprep.subr.bf16.mxu0 0
        %1073 = vmatpush1.bf16.msra.mxu0 0
        %1074 = vmatprep.subr.bf16.mxu0 0
        %1075 = vmatpush1.bf16.msra.mxu0 0
        %1076 = vmatprep.subr.bf16.mxu0 0
        %1077 = vmatpush1.bf16.msra.mxu0 0
        %1078 = vmatprep.subr.bf16.mxu0 0
        %1079 = vmatpush1.bf16.msra.mxu0 %v1062
        %1080 = vmatprep.subr.bf16.mxu0 0
        %1081 = vmatpush2.bf16.msra.mxu0 0
        %1082 = vmatprep.subr.bf16.mxu0 0
        %1083 = vmatpush2.bf16.msra.mxu0 0
        %1084 = vmatprep.subr.bf16.mxu0 0
        %1085 = vmatpush2.bf16.msra.mxu0 0
        %1086 = vmatprep.subr.bf16.mxu0 0
        %1087 = vmatpush2.bf16.msra.mxu0 0
        %1088 = vmatprep.subr.bf16.mxu0 0
        %1089 = vmatpush2.bf16.msra.mxu0 0
        %1090 = vmatprep.subr.bf16.mxu0 0
        %1091 = vmatpush2.bf16.msra.mxu0 0
        %1092 = vmatprep.subr.bf16.mxu0 0
        %1093 = vmatpush2.bf16.msra.mxu0 0
        %1094 = vmatprep.subr.bf16.mxu0 0
        %1095 = vmatpush2.bf16.msra.mxu0 0
        %1096 = vmatprep.mubr.bf16.mxu0 0
        %1097 = vmatmul.mubr.bf16.gmra.mxu0 %v1059
        %v1098 = vpop.f32.mrf.mxu0
        %v1099 = vadd.f32 0.0, %v1098
        %v1100 = vpop.f32.mrf.mxu0
        %v1101 = vpop.f32.mrf.mxu0
        %v1102 = vpop.f32.mrf.mxu0
        %1103 = vdwg.mxu0
        %1104 = vrot.lane.b32.xlu0 %v660, 64
        %v1105 = vpop.permute.xlu0 %1104
        %1106 = vrot.lane.b32.xlu0 %v665, 64
        %v1107 = vpop.permute.xlu0 %1106
        %v1109 = vsel %vm673, %v1105, 0
        %v1112 = vsel %vm673, %v1107, 0
        %1114 = vmatprep.subr.bf16.mxu0 0
        %1115 = vmatpush1.bf16.xpose.msra.mxu0 0
        %1116 = vmatprep.subr.bf16.mxu0 0
        %1117 = vmatpush1.bf16.xpose.msra.mxu0 0
        %1118 = vmatprep.subr.bf16.mxu0 0
        %1119 = vmatpush1.bf16.xpose.msra.mxu0 0
        %1120 = vmatprep.subr.bf16.mxu0 0
        %1121 = vmatpush1.bf16.xpose.msra.mxu0 0
        %1122 = vmatprep.subr.bf16.mxu0 0
        %1123 = vmatpush1.bf16.xpose.msra.mxu0 0
        %1124 = vmatprep.subr.bf16.mxu0 0
        %1125 = vmatpush1.bf16.xpose.msra.mxu0 0
        %1126 = vmatprep.subr.bf16.mxu0 0
        %1127 = vmatpush1.bf16.xpose.msra.mxu0 0
        %1128 = vmatprep.subr.bf16.mxu0 0
        %1129 = vmatpush1.bf16.xpose.msra.mxu0 %v1112
        %1130 = vmatprep.subr.bf16.mxu0 0
        %1131 = vmatpush2.bf16.xpose.msra.mxu0 0
        %1132 = vmatprep.subr.bf16.mxu0 0
        %1133 = vmatpush2.bf16.xpose.msra.mxu0 0
        %1134 = vmatprep.subr.bf16.mxu0 0
        %1135 = vmatpush2.bf16.xpose.msra.mxu0 0
        %1136 = vmatprep.subr.bf16.mxu0 0
        %1137 = vmatpush2.bf16.xpose.msra.mxu0 0
        %1138 = vmatprep.subr.bf16.mxu0 0
        %1139 = vmatpush2.bf16.xpose.msra.mxu0 0
        %1140 = vmatprep.subr.bf16.mxu0 0
        %1141 = vmatpush2.bf16.xpose.msra.mxu0 0
        %1142 = vmatprep.subr.bf16.mxu0 0
        %1143 = vmatpush2.bf16.xpose.msra.mxu0 0
        %1144 = vmatprep.subr.bf16.mxu0 0
        %1145 = vmatpush2.bf16.xpose.msra.mxu0 0
        %1146 = vmatprep.mubr.bf16.mxu0 0
        %1147 = vmatmul.mubr.bf16.gmra.mxu0 %v1109
        %v1148 = vpop.f32.mrf.mxu0
        %v1149 = vadd.f32 %v672, %v1148
        %v1150 = vpop.f32.mrf.mxu0
        %v1151 = vpop.f32.mrf.mxu0
        %v1152 = vpop.f32.mrf.mxu0
        %1153 = vdwg.mxu0
        %1154 = vrot.lane.b32.xlu0 %v661, 64
        %v1155 = vpop.permute.xlu0 %1154
        %1156 = vrot.lane.b32.xlu0 %v666, 64
        %v1157 = vpop.permute.xlu0 %1156
        %v1159 = vsel %vm673, %v1155, 0
        %v1162 = vsel %vm673, %v1157, 0
        %1164 = vmatprep.subr.bf16.mxu0 0
        %1165 = vmatpush1.bf16.xpose.msra.mxu0 0
        %1166 = vmatprep.subr.bf16.mxu0 0
        %1167 = vmatpush1.bf16.xpose.msra.mxu0 0
        %1168 = vmatprep.subr.bf16.mxu0 0
        %1169 = vmatpush1.bf16.xpose.msra.mxu0 0
        %1170 = vmatprep.subr.bf16.mxu0 0
        %1171 = vmatpush1.bf16.xpose.msra.mxu0 0
        %1172 = vmatprep.subr.bf16.mxu0 0
        %1173 = vmatpush1.bf16.xpose.msra.mxu0 0
        %1174 = vmatprep.subr.bf16.mxu0 0
        %1175 = vmatpush1.bf16.xpose.msra.mxu0 0
        %1176 = vmatprep.subr.bf16.mxu0 0
        %1177 = vmatpush1.bf16.xpose.msra.mxu0 0
        %1178 = vmatprep.subr.bf16.mxu0 0
        %1179 = vmatpush1.bf16.xpose.msra.mxu0 %v1162
        %1180 = vmatprep.subr.bf16.mxu0 0
        %1181 = vmatpush2.bf16.xpose.msra.mxu0 0
        %1182 = vmatprep.subr.bf16.mxu0 0
        %1183 = vmatpush2.bf16.xpose.msra.mxu0 0
        %1184 = vmatprep.subr.bf16.mxu0 0
        %1185 = vmatpush2.bf16.xpose.msra.mxu0 0
        %1186 = vmatprep.subr.bf16.mxu0 0
        %1187 = vmatpush2.bf16.xpose.msra.mxu0 0
        %1188 = vmatprep.subr.bf16.mxu0 0
        %1189 = vmatpush2.bf16.xpose.msra.mxu0 0
        %1190 = vmatprep.subr.bf16.mxu0 0
        %1191 = vmatpush2.bf16.xpose.msra.mxu0 0
        %1192 = vmatprep.subr.bf16.mxu0 0
        %1193 = vmatpush2.bf16.xpose.msra.mxu0 0
        %1194 = vmatprep.subr.bf16.mxu0 0
        %1195 = vmatpush2.bf16.xpose.msra.mxu0 0
        %1196 = vmatprep.mubr.bf16.mxu0 0
        %1197 = vmatmul.mubr.bf16.gmra.mxu0 %v1159
        %v1198 = vpop.f32.mrf.mxu0
        %v1199 = vadd.f32 %v672, %v1198
        %v1200 = vpop.f32.mrf.mxu0
        %v1201 = vpop.f32.mrf.mxu0
        %v1202 = vpop.f32.mrf.mxu0
        %1203 = vdwg.mxu0
        %v1204 = vsel %vm766, %v1149, -inf
        %1205 = vmax.xlane.f32.xlu0 %v1204
        %v1206 = vpop.xlane.xlu0 %1205
        %v1207 = vsel %vm766, %v1199, -inf
        %1208 = vmax.xlane.f32.xlu0 %v1207
        %v1209 = vpop.xlane.xlu0 %1208
        %v1210 = vsub.f32 %v1149, %v1206
        %v1211 = vsub.f32 %v1199, %v1209
        %v1212 = vmul.f32 %v1210, 1.442695
        %v1213 = vpow.pop %v1212
        %v1214 = vmul.f32 %v1211, 1.442695
        %v1215 = vpow.pop %v1214
        %v1216 = vsel %vm766, %v1213, 0.0
        %1217 = vadd.xlane.f32.xlu0 %v1216
        %v1218 = vpop.xlane.xlu0 %1217
        %v1219 = vsel %vm766, %v1215, 0.0
        %1220 = vadd.xlane.f32.xlu0 %v1219
        %v1221 = vpop.xlane.xlu0 %1220
        %v1222 = vrcp.pop %v1218
        %v1223 = vrcp.pop %v1221
        %v1224 = vmul.f32 %v1213, %v1222
        %v1225 = vmul.f32 %v1215, %v1223
        %v1226 = vpack.c.bf16 %v1224, %v1224
        %v1227 = vpack.c.bf16 %v1225, %v1225
        %1228 = vrot.lane.b32.xlu0 %v670, 64
        %v1229 = vpop.permute.xlu0 %1228
        %v1231 = vsel %vm766, %v1226, 0
        %v1234 = vsel %vm794, %v1229, 0
        %1236 = vmatprep.subr.bf16.mxu0 0
        %1237 = vmatpush1.bf16.msra.mxu0 0
        %1238 = vmatprep.subr.bf16.mxu0 0
        %1239 = vmatpush1.bf16.msra.mxu0 0
        %1240 = vmatprep.subr.bf16.mxu0 0
        %1241 = vmatpush1.bf16.msra.mxu0 0
        %1242 = vmatprep.subr.bf16.mxu0 0
        %1243 = vmatpush1.bf16.msra.mxu0 0
        %1244 = vmatprep.subr.bf16.mxu0 0
        %1245 = vmatpush1.bf16.msra.mxu0 0
        %1246 = vmatprep.subr.bf16.mxu0 0
        %1247 = vmatpush1.bf16.msra.mxu0 0
        %1248 = vmatprep.subr.bf16.mxu0 0
        %1249 = vmatpush1.bf16.msra.mxu0 0
        %1250 = vmatprep.subr.bf16.mxu0 0
        %1251 = vmatpush1.bf16.msra.mxu0 %v1234
        %1252 = vmatprep.subr.bf16.mxu0 0
        %1253 = vmatpush2.bf16.msra.mxu0 0
        %1254 = vmatprep.subr.bf16.mxu0 0
        %1255 = vmatpush2.bf16.msra.mxu0 0
        %1256 = vmatprep.subr.bf16.mxu0 0
        %1257 = vmatpush2.bf16.msra.mxu0 0
        %1258 = vmatprep.subr.bf16.mxu0 0
        %1259 = vmatpush2.bf16.msra.mxu0 0
        %1260 = vmatprep.subr.bf16.mxu0 0
        %1261 = vmatpush2.bf16.msra.mxu0 0
        %1262 = vmatprep.subr.bf16.mxu0 0
        %1263 = vmatpush2.bf16.msra.mxu0 0
        %1264 = vmatprep.subr.bf16.mxu0 0
        %1265 = vmatpush2.bf16.msra.mxu0 0
        %1266 = vmatprep.subr.bf16.mxu0 0
        %1267 = vmatpush2.bf16.msra.mxu0 0
        %1268 = vmatprep.mubr.bf16.mxu0 0
        %1269 = vmatmul.mubr.bf16.gmra.mxu0 %v1231
        %v1270 = vpop.f32.mrf.mxu0
        %v1271 = vadd.f32 0.0, %v1270
        %v1272 = vpop.f32.mrf.mxu0
        %v1273 = vpop.f32.mrf.mxu0
        %v1274 = vpop.f32.mrf.mxu0
        %1275 = vdwg.mxu0
        %1276 = vrot.lane.b32.xlu0 %v671, 64
        %v1277 = vpop.permute.xlu0 %1276
        %v1279 = vsel %vm766, %v1227, 0
        %v1282 = vsel %vm794, %v1277, 0
        %1284 = vmatprep.subr.bf16.mxu0 0
        %1285 = vmatpush1.bf16.msra.mxu0 0
        %1286 = vmatprep.subr.bf16.mxu0 0
        %1287 = vmatpush1.bf16.msra.mxu0 0
        %1288 = vmatprep.subr.bf16.mxu0 0
        %1289 = vmatpush1.bf16.msra.mxu0 0
        %1290 = vmatprep.subr.bf16.mxu0 0
        %1291 = vmatpush1.bf16.msra.mxu0 0
        %1292 = vmatprep.subr.bf16.mxu0 0
        %1293 = vmatpush1.bf16.msra.mxu0 0
        %1294 = vmatprep.subr.bf16.mxu0 0
        %1295 = vmatpush1.bf16.msra.mxu0 0
        %1296 = vmatprep.subr.bf16.mxu0 0
        %1297 = vmatpush1.bf16.msra.mxu0 0
        %1298 = vmatprep.subr.bf16.mxu0 0
        %1299 = vmatpush1.bf16.msra.mxu0 %v1282
        %1300 = vmatprep.subr.bf16.mxu0 0
        %1301 = vmatpush2.bf16.msra.mxu0 0
        %1302 = vmatprep.subr.bf16.mxu0 0
        %1303 = vmatpush2.bf16.msra.mxu0 0
        %1304 = vmatprep.subr.bf16.mxu0 0
        %1305 = vmatpush2.bf16.msra.mxu0 0
        %1306 = vmatprep.subr.bf16.mxu0 0
        %1307 = vmatpush2.bf16.msra.mxu0 0
        %1308 = vmatprep.subr.bf16.mxu0 0
        %1309 = vmatpush2.bf16.msra.mxu0 0
        %1310 = vmatprep.subr.bf16.mxu0 0
        %1311 = vmatpush2.bf16.msra.mxu0 0
        %1312 = vmatprep.subr.bf16.mxu0 0
        %1313 = vmatpush2.bf16.msra.mxu0 0
        %1314 = vmatprep.subr.bf16.mxu0 0
        %1315 = vmatpush2.bf16.msra.mxu0 0
        %1316 = vmatprep.mubr.bf16.mxu0 0
        %1317 = vmatmul.mubr.bf16.gmra.mxu0 %v1279
        %v1318 = vpop.f32.mrf.mxu0
        %v1319 = vadd.f32 0.0, %v1318
        %v1320 = vpop.f32.mrf.mxu0
        %v1321 = vpop.f32.mrf.mxu0
        %v1322 = vpop.f32.mrf.mxu0
        %1323 = vdwg.mxu0
        %1324 = vrot.lane.b32.xlu0 %v660, 32
        %v1325 = vpop.permute.xlu0 %1324
        %1326 = vrot.lane.b32.xlu0 %v665, 32
        %v1327 = vpop.permute.xlu0 %1326
        %v1329 = vsel %vm673, %v1325, 0
        %v1332 = vsel %vm673, %v1327, 0
        %1334 = vmatprep.subr.bf16.mxu0 0
        %1335 = vmatpush1.bf16.xpose.msra.mxu0 0
        %1336 = vmatprep.subr.bf16.mxu0 0
        %1337 = vmatpush1.bf16.xpose.msra.mxu0 0
        %1338 = vmatprep.subr.bf16.mxu0 0
        %1339 = vmatpush1.bf16.xpose.msra.mxu0 0
        %1340 = vmatprep.subr.bf16.mxu0 0
        %1341 = vmatpush1.bf16.xpose.msra.mxu0 0
        %1342 = vmatprep.subr.bf16.mxu0 0
        %1343 = vmatpush1.bf16.xpose.msra.mxu0 0
        %1344 = vmatprep.subr.bf16.mxu0 0
        %1345 = vmatpush1.bf16.xpose.msra.mxu0 0
        %1346 = vmatprep.subr.bf16.mxu0 0
        %1347 = vmatpush1.bf16.xpose.msra.mxu0 0
        %1348 = vmatprep.subr.bf16.mxu0 0
        %1349 = vmatpush1.bf16.xpose.msra.mxu0 %v1332
        %1350 = vmatprep.subr.bf16.mxu0 0
        %1351 = vmatpush2.bf16.xpose.msra.mxu0 0
        %1352 = vmatprep.subr.bf16.mxu0 0
        %1353 = vmatpush2.bf16.xpose.msra.mxu0 0
        %1354 = vmatprep.subr.bf16.mxu0 0
        %1355 = vmatpush2.bf16.xpose.msra.mxu0 0
        %1356 = vmatprep.subr.bf16.mxu0 0
        %1357 = vmatpush2.bf16.xpose.msra.mxu0 0
        %1358 = vmatprep.subr.bf16.mxu0 0
        %1359 = vmatpush2.bf16.xpose.msra.mxu0 0
        %1360 = vmatprep.subr.bf16.mxu0 0
        %1361 = vmatpush2.bf16.xpose.msra.mxu0 0
        %1362 = vmatprep.subr.bf16.mxu0 0
        %1363 = vmatpush2.bf16.xpose.msra.mxu0 0
        %1364 = vmatprep.subr.bf16.mxu0 0
        %1365 = vmatpush2.bf16.xpose.msra.mxu0 0
        %1366 = vmatprep.mubr.bf16.mxu0 0
        %1367 = vmatmul.mubr.bf16.gmra.mxu0 %v1329
        %v1368 = vpop.f32.mrf.mxu0
        %v1369 = vadd.f32 %v672, %v1368
        %v1370 = vpop.f32.mrf.mxu0
        %v1371 = vpop.f32.mrf.mxu0
        %v1372 = vpop.f32.mrf.mxu0
        %1373 = vdwg.mxu0
        %1374 = vrot.lane.b32.xlu0 %v661, 32
        %v1375 = vpop.permute.xlu0 %1374
        %1376 = vrot.lane.b32.xlu0 %v666, 32
        %v1377 = vpop.permute.xlu0 %1376
        %v1379 = vsel %vm673, %v1375, 0
        %v1382 = vsel %vm673, %v1377, 0
        %1384 = vmatprep.subr.bf16.mxu0 0
        %1385 = vmatpush1.bf16.xpose.msra.mxu0 0
        %1386 = vmatprep.subr.bf16.mxu0 0
        %1387 = vmatpush1.bf16.xpose.msra.mxu0 0
        %1388 = vmatprep.subr.bf16.mxu0 0
        %1389 = vmatpush1.bf16.xpose.msra.mxu0 0
        %1390 = vmatprep.subr.bf16.mxu0 0
        %1391 = vmatpush1.bf16.xpose.msra.mxu0 0
        %1392 = vmatprep.subr.bf16.mxu0 0
        %1393 = vmatpush1.bf16.xpose.msra.mxu0 0
        %1394 = vmatprep.subr.bf16.mxu0 0
        %1395 = vmatpush1.bf16.xpose.msra.mxu0 0
        %1396 = vmatprep.subr.bf16.mxu0 0
        %1397 = vmatpush1.bf16.xpose.msra.mxu0 0
        %1398 = vmatprep.subr.bf16.mxu0 0
        %1399 = vmatpush1.bf16.xpose.msra.mxu0 %v1382
        %1400 = vmatprep.subr.bf16.mxu0 0
        %1401 = vmatpush2.bf16.xpose.msra.mxu0 0
        %1402 = vmatprep.subr.bf16.mxu0 0
        %1403 = vmatpush2.bf16.xpose.msra.mxu0 0
        %1404 = vmatprep.subr.bf16.mxu0 0
        %1405 = vmatpush2.bf16.xpose.msra.mxu0 0
        %1406 = vmatprep.subr.bf16.mxu0 0
        %1407 = vmatpush2.bf16.xpose.msra.mxu0 0
        %1408 = vmatprep.subr.bf16.mxu0 0
        %1409 = vmatpush2.bf16.xpose.msra.mxu0 0
        %1410 = vmatprep.subr.bf16.mxu0 0
        %1411 = vmatpush2.bf16.xpose.msra.mxu0 0
        %1412 = vmatprep.subr.bf16.mxu0 0
        %1413 = vmatpush2.bf16.xpose.msra.mxu0 0
        %1414 = vmatprep.subr.bf16.mxu0 0
        %1415 = vmatpush2.bf16.xpose.msra.mxu0 0
        %1416 = vmatprep.mubr.bf16.mxu0 0
        %1417 = vmatmul.mubr.bf16.gmra.mxu0 %v1379
        %v1418 = vpop.f32.mrf.mxu0
        %v1419 = vadd.f32 %v672, %v1418
        %v1420 = vpop.f32.mrf.mxu0
        %v1421 = vpop.f32.mrf.mxu0
        %v1422 = vpop.f32.mrf.mxu0
        %1423 = vdwg.mxu0
        %v1424 = vsel %vm766, %v1369, -inf
        %1425 = vmax.xlane.f32.xlu0 %v1424
        %v1426 = vpop.xlane.xlu0 %1425
        %v1427 = vsel %vm766, %v1419, -inf
        %1428 = vmax.xlane.f32.xlu0 %v1427
        %v1429 = vpop.xlane.xlu0 %1428
        %v1430 = vsub.f32 %v1369, %v1426
        %v1431 = vsub.f32 %v1419, %v1429
        %v1432 = vmul.f32 %v1430, 1.442695
        %v1433 = vpow.pop %v1432
        %v1434 = vmul.f32 %v1431, 1.442695
        %v1435 = vpow.pop %v1434
        %v1436 = vsel %vm766, %v1433, 0.0
        %1437 = vadd.xlane.f32.xlu0 %v1436
        %v1438 = vpop.xlane.xlu0 %1437
        %v1439 = vsel %vm766, %v1435, 0.0
        %1440 = vadd.xlane.f32.xlu0 %v1439
        %v1441 = vpop.xlane.xlu0 %1440
        %v1442 = vrcp.pop %v1438
        %v1443 = vrcp.pop %v1441
        %v1444 = vmul.f32 %v1433, %v1442
        %v1445 = vmul.f32 %v1435, %v1443
        %v1446 = vpack.c.bf16 %v1444, %v1444
        %v1447 = vpack.c.bf16 %v1445, %v1445
        %1448 = vrot.lane.b32.xlu0 %v670, 32
        %v1449 = vpop.permute.xlu0 %1448
        %v1451 = vsel %vm766, %v1446, 0
        %v1454 = vsel %vm794, %v1449, 0
        %1456 = vmatprep.subr.bf16.mxu0 0
        %1457 = vmatpush1.bf16.msra.mxu0 0
        %1458 = vmatprep.subr.bf16.mxu0 0
        %1459 = vmatpush1.bf16.msra.mxu0 0
        %1460 = vmatprep.subr.bf16.mxu0 0
        %1461 = vmatpush1.bf16.msra.mxu0 0
        %1462 = vmatprep.subr.bf16.mxu0 0
        %1463 = vmatpush1.bf16.msra.mxu0 0
        %1464 = vmatprep.subr.bf16.mxu0 0
        %1465 = vmatpush1.bf16.msra.mxu0 0
        %1466 = vmatprep.subr.bf16.mxu0 0
        %1467 = vmatpush1.bf16.msra.mxu0 0
        %1468 = vmatprep.subr.bf16.mxu0 0
        %1469 = vmatpush1.bf16.msra.mxu0 0
        %1470 = vmatprep.subr.bf16.mxu0 0
        %1471 = vmatpush1.bf16.msra.mxu0 %v1454
        %1472 = vmatprep.subr.bf16.mxu0 0
        %1473 = vmatpush2.bf16.msra.mxu0 0
        %1474 = vmatprep.subr.bf16.mxu0 0
        %1475 = vmatpush2.bf16.msra.mxu0 0
        %1476 = vmatprep.subr.bf16.mxu0 0
        %1477 = vmatpush2.bf16.msra.mxu0 0
        %1478 = vmatprep.subr.bf16.mxu0 0
        %1479 = vmatpush2.bf16.msra.mxu0 0
        %1480 = vmatprep.subr.bf16.mxu0 0
        %1481 = vmatpush2.bf16.msra.mxu0 0
        %1482 = vmatprep.subr.bf16.mxu0 0
        %1483 = vmatpush2.bf16.msra.mxu0 0
        %1484 = vmatprep.subr.bf16.mxu0 0
        %1485 = vmatpush2.bf16.msra.mxu0 0
        %1486 = vmatprep.subr.bf16.mxu0 0
        %1487 = vmatpush2.bf16.msra.mxu0 0
        %1488 = vmatprep.mubr.bf16.mxu0 0
        %1489 = vmatmul.mubr.bf16.gmra.mxu0 %v1451
        %v1490 = vpop.f32.mrf.mxu0
        %v1491 = vadd.f32 0.0, %v1490
        %v1492 = vpop.f32.mrf.mxu0
        %v1493 = vpop.f32.mrf.mxu0
        %v1494 = vpop.f32.mrf.mxu0
        %1495 = vdwg.mxu0
        %1496 = vrot.lane.b32.xlu0 %v671, 32
        %v1497 = vpop.permute.xlu0 %1496
        %v1499 = vsel %vm766, %v1447, 0
        %v1502 = vsel %vm794, %v1497, 0
        %1504 = vmatprep.subr.bf16.mxu0 0
        %1505 = vmatpush1.bf16.msra.mxu0 0
        %1506 = vmatprep.subr.bf16.mxu0 0
        %1507 = vmatpush1.bf16.msra.mxu0 0
        %1508 = vmatprep.subr.bf16.mxu0 0
        %1509 = vmatpush1.bf16.msra.mxu0 0
        %1510 = vmatprep.subr.bf16.mxu0 0
        %1511 = vmatpush1.bf16.msra.mxu0 0
        %1512 = vmatprep.subr.bf16.mxu0 0
        %1513 = vmatpush1.bf16.msra.mxu0 0
        %1514 = vmatprep.subr.bf16.mxu0 0
        %1515 = vmatpush1.bf16.msra.mxu0 0
        %1516 = vmatprep.subr.bf16.mxu0 0
        %1517 = vmatpush1.bf16.msra.mxu0 0
        %1518 = vmatprep.subr.bf16.mxu0 0
        %1519 = vmatpush1.bf16.msra.mxu0 %v1502
        %1520 = vmatprep.subr.bf16.mxu0 0
        %1521 = vmatpush2.bf16.msra.mxu0 0
        %1522 = vmatprep.subr.bf16.mxu0 0
        %1523 = vmatpush2.bf16.msra.mxu0 0
        %1524 = vmatprep.subr.bf16.mxu0 0
        %1525 = vmatpush2.bf16.msra.mxu0 0
        %1526 = vmatprep.subr.bf16.mxu0 0
        %1527 = vmatpush2.bf16.msra.mxu0 0
        %1528 = vmatprep.subr.bf16.mxu0 0
        %1529 = vmatpush2.bf16.msra.mxu0 0
        %1530 = vmatprep.subr.bf16.mxu0 0
        %1531 = vmatpush2.bf16.msra.mxu0 0
        %1532 = vmatprep.subr.bf16.mxu0 0
        %1533 = vmatpush2.bf16.msra.mxu0 0
        %1534 = vmatprep.subr.bf16.mxu0 0
        %1535 = vmatpush2.bf16.msra.mxu0 0
        %1536 = vmatprep.mubr.bf16.mxu0 0
        %1537 = vmatmul.mubr.bf16.gmra.mxu0 %v1499
        %v1538 = vpop.f32.mrf.mxu0
        %v1539 = vadd.f32 0.0, %v1538
        %v1540 = vpop.f32.mrf.mxu0
        %v1541 = vpop.f32.mrf.mxu0
        %v1542 = vpop.f32.mrf.mxu0
        %1543 = vdwg.mxu0
        %1546 = vrot.lane.b32.xlu0 %v1051, 32
        %v1547 = vpop.permute.xlu0 %1546
        %1548 = vrot.lane.b32.xlu0 %v1099, 32
        %v1549 = vpop.permute.xlu0 %1548
        %1554 = vrot.lane.b32.xlu0 %v1271, 64
        %v1555 = vpop.permute.xlu0 %1554
        %1556 = vrot.lane.b32.xlu0 %v1319, 64
        %v1557 = vpop.permute.xlu0 %1556
        %1562 = vrot.lane.b32.xlu0 %v1491, 96
        %v1563 = vpop.permute.xlu0 %1562
        %1564 = vrot.lane.b32.xlu0 %v1539, 96
        %v1565 = vpop.permute.xlu0 %1564
        %v1568 = vsel %vm673, %v833, %v1547
        %v1569 = vsel %vm673, %v879, %v1549
        %vm1570 = vcmask 523264
        %v1571 = vsel %vm1570, %v1568, %v1555
        %v1572 = vsel %vm1570, %v1569, %v1557
        %vm1573 = vcmask 785408
        %v1574 = vsel %vm1573, %v1571, %v1563
        %v1575 = vsel %vm1573, %v1572, %v1565
        %v1576 = vpack.c.bf16 %v1575, %v1574
        %v1577 = vld [vmem:[%s312] sm:$0xf]
        %v1578 = vld [vmem:[%s312 + $0x4] sm:$0xf]
        %v1579 = vld [vmem:[%s312 + $0x8] sm:$0xf]
        %v1580 = vld [vmem:[%s312 + $0xc] sm:$0xf]
        %v1581 = vld [vmem:[%s312 + $0x10] sm:$0xf]
        %v1582 = vld [vmem:[%s312 + $0x14] sm:$0xf]
        %v1583 = vld [vmem:[%s312 + $0x18] sm:$0xf]
        %v1584 = vld [vmem:[%s312 + $0x1c] sm:$0xf]
        %v1585 = vld [vmem:[%s312 + $0x20] sm:$0xf]
        %v1586 = vld [vmem:[%s312 + $0x24] sm:$0xf]
        %v1587 = vld [vmem:[%s312 + $0x28] sm:$0xf]
        %v1588 = vld [vmem:[%s312 + $0x2c] sm:$0xf]
        %v1589 = vld [vmem:[%s312 + $0x30] sm:$0xf]
        %v1590 = vld [vmem:[%s312 + $0x34] sm:$0xf]
        %v1591 = vld [vmem:[%s312 + $0x38] sm:$0xf]
        %v1592 = vld [vmem:[%s312 + $0x3c] sm:$0xf]
        %v1593 = vlaneseq
        %v1594 = vshrl.u32 %v1593, 7
        %v1595 = vsub.s32 1, %v1594
        %v1596 = vrot.slane %v395, %v1595
        %v1613 = vunpack.c.l.b16 %v1577
        %v1614 = vunpack.c.l.b16 %v1578
        %v1615 = vunpack.c.l.b16 %v1579
        %v1616 = vunpack.c.l.b16 %v1580
        %v1617 = vunpack.c.l.b16 %v1581
        %v1618 = vunpack.c.l.b16 %v1582
        %v1619 = vunpack.c.l.b16 %v1583
        %v1620 = vunpack.c.l.b16 %v1584
        %v1621 = vunpack.c.l.b16 %v1585
        %v1622 = vunpack.c.l.b16 %v1586
        %v1623 = vunpack.c.l.b16 %v1587
        %v1624 = vunpack.c.l.b16 %v1588
        %v1625 = vunpack.c.l.b16 %v1589
        %v1626 = vunpack.c.l.b16 %v1590
        %v1627 = vunpack.c.l.b16 %v1591
        %v1628 = vunpack.c.l.b16 %v1592
        %v1629 = vpack.c.b16 %v1614, %v1613
        %v1630 = vpack.c.b16 %v1616, %v1615
        %v1631 = vpack.c.b16 %v1618, %v1617
        %v1632 = vpack.c.b16 %v1620, %v1619
        %v1633 = vpack.c.b16 %v1622, %v1621
        %v1634 = vpack.c.b16 %v1624, %v1623
        %v1635 = vpack.c.b16 %v1626, %v1625
        %v1636 = vpack.c.b16 %v1628, %v1627
        %1645 = vmatprep.subr.bf16.mxu0 0
        %1646 = vmatpush1.bf16.msra.mxu0 %v1636
        %1647 = vmatprep.subr.bf16.mxu0 0
        %1648 = vmatpush1.bf16.msra.mxu0 %v1635
        %1649 = vmatprep.subr.bf16.mxu0 0
        %1650 = vmatpush1.bf16.msra.mxu0 %v1634
        %1651 = vmatprep.subr.bf16.mxu0 0
        %1652 = vmatpush1.bf16.msra.mxu0 %v1633
        %1653 = vmatprep.subr.bf16.mxu0 0
        %1654 = vmatpush1.bf16.msra.mxu0 %v1632
        %1655 = vmatprep.subr.bf16.mxu0 0
        %1656 = vmatpush1.bf16.msra.mxu0 %v1631
        %1657 = vmatprep.subr.bf16.mxu0 0
        %1658 = vmatpush1.bf16.msra.mxu0 %v1630
        %1659 = vmatprep.subr.bf16.mxu0 0
        %1660 = vmatpush1.bf16.msra.mxu0 %v1629
        %1661 = vmatprep.subr.bf16.mxu0 0
        %1662 = vmatpush2.bf16.msra.mxu0 0
        %1663 = vmatprep.subr.bf16.mxu0 0
        %1664 = vmatpush2.bf16.msra.mxu0 0
        %1665 = vmatprep.subr.bf16.mxu0 0
        %1666 = vmatpush2.bf16.msra.mxu0 0
        %1667 = vmatprep.subr.bf16.mxu0 0
        %1668 = vmatpush2.bf16.msra.mxu0 0
        %1669 = vmatprep.subr.bf16.mxu0 0
        %1670 = vmatpush2.bf16.msra.mxu0 0
        %1671 = vmatprep.subr.bf16.mxu0 0
        %1672 = vmatpush2.bf16.msra.mxu0 0
        %1673 = vmatprep.subr.bf16.mxu0 0
        %1674 = vmatpush2.bf16.msra.mxu0 0
        %1675 = vmatprep.subr.bf16.mxu0 0
        %1676 = vmatpush2.bf16.msra.mxu0 0
        %1677 = vmatprep.mubr.bf16.mxu0 0
        %1678 = vmatmul.mubr.bf16.gmra.mxu0 %v1576
        %v1679 = vpop.f32.mrf.mxu0
        %v1680 = vadd.f32 %v1596, %v1679
        %v1681 = vpop.f32.mrf.mxu0
        %v1682 = vpop.f32.mrf.mxu0
        %v1683 = vadd.f32 %v1596, %v1682
        %v1684 = vpop.f32.mrf.mxu0
        %1685 = vdwg.mxu0
        %v1686 = vadd.f32 %v1680, %v392
        %v1687 = vadd.f32 %v1683, %v393
        %1688 = vadd.xlane.f32.xlu0 %v1686
        %v1689 = vpop.xlane.xlu0 %1688
        %1690 = vadd.xlane.f32.xlu0 %v1687
        %v1691 = vpop.xlane.xlu0 %1690
        %v1692 = vrcp.pop 128.0
        %v1693 = vmul.f32 %v1689, %v1692
        %v1694 = vmul.f32 %v1691, %v1692
        %v1695 = vsub.f32 %v1686, %v1693
        %v1696 = vsub.f32 %v1687, %v1694
        %v1697 = vmul.f32 %v1695, %v1695
        %v1698 = vmul.f32 %v1696, %v1696
        %1699 = vadd.xlane.f32.xlu0 %v1697
        %v1700 = vpop.xlane.xlu0 %1699
        %1701 = vadd.xlane.f32.xlu0 %v1698
        %v1702 = vpop.xlane.xlu0 %1701
        %v1703 = vmul.f32 %v1700, %v1692
        %v1704 = vmul.f32 %v1702, %v1692
        %v1705 = vadd.f32 %v1703, 1e-05
        %v1706 = vadd.f32 %v1704, 1e-05
        %v1707 = vrsqrt.pop %v1705
        %v1708 = vrsqrt.pop %v1706
        %v1709 = vmul.f32 %v1695, %v1707
        %v1710 = vmul.f32 %v1696, %v1708
        %v1711 = vlaneseq
        %v1712 = vshrl.u32 %v1711, 7
        %v1713 = vsub.s32 2, %v1712
        %v1714 = vrot.slane %v395, %v1713
        %v1715 = vmul.f32 %v1709, %v1714
        %v1716 = vmul.f32 %v1710, %v1714
        %v1717 = vlaneseq
        %v1718 = vshrl.u32 %v1717, 7
        %v1719 = vsub.s32 3, %v1718
        %v1720 = vrot.slane %v395, %v1719
        %v1721 = vadd.f32 %v1715, %v1720
        %v1722 = vadd.f32 %v1716, %v1720
        %v1723 = vpack.c.bf16 %v1722, %v1721
        %v1724 = vld [vmem:[%s369] sm:$0xff]
        %v1725 = vld [vmem:[%s369 + $0x8] sm:$0xff]
        %v1726 = vld [vmem:[%s369 + $0x10] sm:$0xff]
        %v1727 = vld [vmem:[%s369 + $0x18] sm:$0xff]
        %v1728 = vld [vmem:[%s369 + $0x20] sm:$0xff]
        %v1729 = vld [vmem:[%s369 + $0x28] sm:$0xff]
        %v1730 = vld [vmem:[%s369 + $0x30] sm:$0xff]
        %v1731 = vld [vmem:[%s369 + $0x38] sm:$0xff]
        %v1732 = vld [vmem:[%s369 + $0x40] sm:$0xff]
        %v1733 = vld [vmem:[%s369 + $0x48] sm:$0xff]
        %v1734 = vld [vmem:[%s369 + $0x50] sm:$0xff]
        %v1735 = vld [vmem:[%s369 + $0x58] sm:$0xff]
        %v1736 = vld [vmem:[%s369 + $0x60] sm:$0xff]
        %v1737 = vld [vmem:[%s369 + $0x68] sm:$0xff]
        %v1738 = vld [vmem:[%s369 + $0x70] sm:$0xff]
        %v1739 = vld [vmem:[%s369 + $0x78] sm:$0xff]
        %v1740 = vlaneseq
        %v1741 = vshrl.u32 %v1740, 7
        %v1742 = vsub.s32 4, %v1741
        %v1743 = vrot.slane %v395, %v1742
        %v1744 = vlaneseq
        %v1745 = vshrl.u32 %v1744, 7
        %v1746 = vsub.s32 4, %v1745
        %v1747 = vrot.slane %v396, %v1746
        %v1764 = vunpack.c.l.b16 %v1724
        %v1765 = vunpack.c.h.b16 %v1724
        %v1766 = vunpack.c.l.b16 %v1725
        %v1767 = vunpack.c.h.b16 %v1725
        %v1768 = vunpack.c.l.b16 %v1726
        %v1769 = vunpack.c.h.b16 %v1726
        %v1770 = vunpack.c.l.b16 %v1727
        %v1771 = vunpack.c.h.b16 %v1727
        %v1772 = vunpack.c.l.b16 %v1728
        %v1773 = vunpack.c.h.b16 %v1728
        %v1774 = vunpack.c.l.b16 %v1729
        %v1775 = vunpack.c.h.b16 %v1729
        %v1776 = vunpack.c.l.b16 %v1730
        %v1777 = vunpack.c.h.b16 %v1730
        %v1778 = vunpack.c.l.b16 %v1731
        %v1779 = vunpack.c.h.b16 %v1731
        %v1780 = vunpack.c.l.b16 %v1732
        %v1781 = vunpack.c.h.b16 %v1732
        %v1782 = vunpack.c.l.b16 %v1733
        %v1783 = vunpack.c.h.b16 %v1733
        %v1784 = vunpack.c.l.b16 %v1734
        %v1785 = vunpack.c.h.b16 %v1734
        %v1786 = vunpack.c.l.b16 %v1735
        %v1787 = vunpack.c.h.b16 %v1735
        %v1788 = vunpack.c.l.b16 %v1736
        %v1789 = vunpack.c.h.b16 %v1736
        %v1790 = vunpack.c.l.b16 %v1737
        %v1791 = vunpack.c.h.b16 %v1737
        %v1792 = vunpack.c.l.b16 %v1738
        %v1793 = vunpack.c.h.b16 %v1738
        %v1794 = vunpack.c.l.b16 %v1739
        %v1795 = vunpack.c.h.b16 %v1739
        %v1796 = vpack.c.b16 %v1766, %v1764
        %v1797 = vpack.c.b16 %v1767, %v1765
        %v1798 = vpack.c.b16 %v1770, %v1768
        %v1799 = vpack.c.b16 %v1771, %v1769
        %v1800 = vpack.c.b16 %v1774, %v1772
        %v1801 = vpack.c.b16 %v1775, %v1773
        %v1802 = vpack.c.b16 %v1778, %v1776
        %v1803 = vpack.c.b16 %v1779, %v1777
        %v1804 = vpack.c.b16 %v1782, %v1780
        %v1805 = vpack.c.b16 %v1783, %v1781
        %v1806 = vpack.c.b16 %v1786, %v1784
        %v1807 = vpack.c.b16 %v1787, %v1785
        %v1808 = vpack.c.b16 %v1790, %v1788
        %v1809 = vpack.c.b16 %v1791, %v1789
        %v1810 = vpack.c.b16 %v1794, %v1792
        %v1811 = vpack.c.b16 %v1795, %v1793
        %1828 = vmatprep.subr.bf16.mxu0 %v1811
        %1829 = vmatpush1.bf16.msra.mxu0 %v1810
        %1830 = vmatprep.subr.bf16.mxu0 %v1809
        %1831 = vmatpush1.bf16.msra.mxu0 %v1808
        %1832 = vmatprep.subr.bf16.mxu0 %v1807
        %1833 = vmatpush1.bf16.msra.mxu0 %v1806
        %1834 = vmatprep.subr.bf16.mxu0 %v1805
        %1835 = vmatpush1.bf16.msra.mxu0 %v1804
        %1836 = vmatprep.subr.bf16.mxu0 %v1803
        %1837 = vmatpush1.bf16.msra.mxu0 %v1802
        %1838 = vmatprep.subr.bf16.mxu0 %v1801
        %1839 = vmatpush1.bf16.msra.mxu0 %v1800
        %1840 = vmatprep.subr.bf16.mxu0 %v1799
        %1841 = vmatpush1.bf16.msra.mxu0 %v1798
        %1842 = vmatprep.subr.bf16.mxu0 %v1797
        %1843 = vmatpush1.bf16.msra.mxu0 %v1796
        %1844 = vmatprep.subr.bf16.mxu0 0
        %1845 = vmatpush2.bf16.msra.mxu0 0
        %1846 = vmatprep.subr.bf16.mxu0 0
        %1847 = vmatpush2.bf16.msra.mxu0 0
        %1848 = vmatprep.subr.bf16.mxu0 0
        %1849 = vmatpush2.bf16.msra.mxu0 0
        %1850 = vmatprep.subr.bf16.mxu0 0
        %1851 = vmatpush2.bf16.msra.mxu0 0
        %1852 = vmatprep.subr.bf16.mxu0 0
        %1853 = vmatpush2.bf16.msra.mxu0 0
        %1854 = vmatprep.subr.bf16.mxu0 0
        %1855 = vmatpush2.bf16.msra.mxu0 0
        %1856 = vmatprep.subr.bf16.mxu0 0
        %1857 = vmatpush2.bf16.msra.mxu0 0
        %1858 = vmatprep.subr.bf16.mxu0 0
        %1859 = vmatpush2.bf16.msra.mxu0 0
        %1860 = vmatprep.mubr.bf16.mxu0 0
        %1861 = vmatmul.mubr.bf16.gmra.mxu0 %v1723
        %v1862 = vpop.f32.mrf.mxu0
        %v1863 = vadd.f32 %v1743, %v1862
        %v1864 = vpop.f32.mrf.mxu0
        %v1865 = vadd.f32 %v1747, %v1864
        %v1866 = vpop.f32.mrf.mxu0
        %v1867 = vadd.f32 %v1743, %v1866
        %v1868 = vpop.f32.mrf.mxu0
        %v1869 = vadd.f32 %v1747, %v1868
        %1870 = vdwg.mxu0
        %v1871 = vmul.f32 %v1863, %v1863
        %v1872 = vmul.f32 %v1865, %v1865
        %v1873 = vmul.f32 %v1867, %v1867
        %v1874 = vmul.f32 %v1869, %v1869
        %v1875 = vmul.f32 %v1863, %v1871
        %v1876 = vmul.f32 %v1865, %v1872
        %v1877 = vmul.f32 %v1867, %v1873
        %v1878 = vmul.f32 %v1869, %v1874
        %v1879 = vmul.f32 %v1875, 0.044715
        %v1880 = vmul.f32 %v1876, 0.044715
        %v1881 = vmul.f32 %v1877, 0.044715
        %v1882 = vmul.f32 %v1878, 0.044715
        %v1883 = vadd.f32 %v1863, %v1879
        %v1884 = vadd.f32 %v1865, %v1880
        %v1885 = vadd.f32 %v1867, %v1881
        %v1886 = vadd.f32 %v1869, %v1882
        %v1887 = vmul.f32 %v1883, 0.7978846
        %v1888 = vmul.f32 %v1884, 0.7978846
        %v1889 = vmul.f32 %v1885, 0.7978846
        %v1890 = vmul.f32 %v1886, 0.7978846
        %v1891 = vtanh.pop %v1887
        %v1892 = vtanh.pop %v1888
        %v1893 = vtanh.pop %v1889
        %v1894 = vtanh.pop %v1890
        %v1895 = vadd.f32 %v1891, 1.0
        %v1896 = vadd.f32 %v1892, 1.0
        %v1897 = vadd.f32 %v1893, 1.0
        %v1898 = vadd.f32 %v1894, 1.0
        %v1899 = vmul.f32 %v1895, 0.5
        %v1900 = vmul.f32 %v1896, 0.5
        %v1901 = vmul.f32 %v1897, 0.5
        %v1902 = vmul.f32 %v1898, 0.5
        %v1903 = vmul.f32 %v1863, %v1899
        %v1904 = vmul.f32 %v1865, %v1900
        %v1905 = vmul.f32 %v1867, %v1901
        %v1906 = vmul.f32 %v1869, %v1902
        %v1907 = vpack.c.bf16 %v1905, %v1903
        %v1908 = vpack.c.bf16 %v1906, %v1904
        %v1909 = vld [vmem:[%s321] sm:$0xf]
        %v1910 = vld [vmem:[%s321 + $0x4] sm:$0xf]
        %v1911 = vld [vmem:[%s321 + $0x8] sm:$0xf]
        %v1912 = vld [vmem:[%s321 + $0xc] sm:$0xf]
        %v1913 = vld [vmem:[%s321 + $0x10] sm:$0xf]
        %v1914 = vld [vmem:[%s321 + $0x14] sm:$0xf]
        %v1915 = vld [vmem:[%s321 + $0x18] sm:$0xf]
        %v1916 = vld [vmem:[%s321 + $0x1c] sm:$0xf]
        %v1917 = vld [vmem:[%s321 + $0x20] sm:$0xf]
        %v1918 = vld [vmem:[%s321 + $0x24] sm:$0xf]
        %v1919 = vld [vmem:[%s321 + $0x28] sm:$0xf]
        %v1920 = vld [vmem:[%s321 + $0x2c] sm:$0xf]
        %v1921 = vld [vmem:[%s321 + $0x30] sm:$0xf]
        %v1922 = vld [vmem:[%s321 + $0x34] sm:$0xf]
        %v1923 = vld [vmem:[%s321 + $0x38] sm:$0xf]
        %v1924 = vld [vmem:[%s321 + $0x3c] sm:$0xf]
        %v1925 = vld [vmem:[%s321 + $0x40] sm:$0xf]
        %v1926 = vld [vmem:[%s321 + $0x44] sm:$0xf]
        %v1927 = vld [vmem:[%s321 + $0x48] sm:$0xf]
        %v1928 = vld [vmem:[%s321 + $0x4c] sm:$0xf]
        %v1929 = vld [vmem:[%s321 + $0x50] sm:$0xf]
        %v1930 = vld [vmem:[%s321 + $0x54] sm:$0xf]
        %v1931 = vld [vmem:[%s321 + $0x58] sm:$0xf]
        %v1932 = vld [vmem:[%s321 + $0x5c] sm:$0xf]
        %v1933 = vld [vmem:[%s321 + $0x60] sm:$0xf]
        %v1934 = vld [vmem:[%s321 + $0x64] sm:$0xf]
        %v1935 = vld [vmem:[%s321 + $0x68] sm:$0xf]
        %v1936 = vld [vmem:[%s321 + $0x6c] sm:$0xf]
        %v1937 = vld [vmem:[%s321 + $0x70] sm:$0xf]
        %v1938 = vld [vmem:[%s321 + $0x74] sm:$0xf]
        %v1939 = vld [vmem:[%s321 + $0x78] sm:$0xf]
        %v1940 = vld [vmem:[%s321 + $0x7c] sm:$0xf]
        %v1941 = vlaneseq
        %v1942 = vshrl.u32 %v1941, 7
        %v1943 = vsub.s32 5, %v1942
        %v1944 = vrot.slane %v395, %v1943
        %v1977 = vunpack.c.l.b16 %v1909
        %v1978 = vunpack.c.l.b16 %v1910
        %v1979 = vunpack.c.l.b16 %v1911
        %v1980 = vunpack.c.l.b16 %v1912
        %v1981 = vunpack.c.l.b16 %v1913
        %v1982 = vunpack.c.l.b16 %v1914
        %v1983 = vunpack.c.l.b16 %v1915
        %v1984 = vunpack.c.l.b16 %v1916
        %v1985 = vunpack.c.l.b16 %v1917
        %v1986 = vunpack.c.l.b16 %v1918
        %v1987 = vunpack.c.l.b16 %v1919
        %v1988 = vunpack.c.l.b16 %v1920
        %v1989 = vunpack.c.l.b16 %v1921
        %v1990 = vunpack.c.l.b16 %v1922
        %v1991 = vunpack.c.l.b16 %v1923
        %v1992 = vunpack.c.l.b16 %v1924
        %v1993 = vunpack.c.l.b16 %v1925
        %v1994 = vunpack.c.l.b16 %v1926
        %v1995 = vunpack.c.l.b16 %v1927
        %v1996 = vunpack.c.l.b16 %v1928
        %v1997 = vunpack.c.l.b16 %v1929
        %v1998 = vunpack.c.l.b16 %v1930
        %v1999 = vunpack.c.l.b16 %v1931
        %v2000 = vunpack.c.l.b16 %v1932
        %v2001 = vunpack.c.l.b16 %v1933
        %v2002 = vunpack.c.l.b16 %v1934
        %v2003 = vunpack.c.l.b16 %v1935
        %v2004 = vunpack.c.l.b16 %v1936
        %v2005 = vunpack.c.l.b16 %v1937
        %v2006 = vunpack.c.l.b16 %v1938
        %v2007 = vunpack.c.l.b16 %v1939
        %v2008 = vunpack.c.l.b16 %v1940
        %v2009 = vpack.c.b16 %v1978, %v1977
        %v2010 = vpack.c.b16 %v1980, %v1979
        %v2011 = vpack.c.b16 %v1982, %v1981
        %v2012 = vpack.c.b16 %v1984, %v1983
        %v2013 = vpack.c.b16 %v1986, %v1985
        %v2014 = vpack.c.b16 %v1988, %v1987
        %v2015 = vpack.c.b16 %v1990, %v1989
        %v2016 = vpack.c.b16 %v1992, %v1991
        %v2017 = vpack.c.b16 %v1994, %v1993
        %v2018 = vpack.c.b16 %v1996, %v1995
        %v2019 = vpack.c.b16 %v1998, %v1997
        %v2020 = vpack.c.b16 %v2000, %v1999
        %v2021 = vpack.c.b16 %v2002, %v2001
        %v2022 = vpack.c.b16 %v2004, %v2003
        %v2023 = vpack.c.b16 %v2006, %v2005
        %v2024 = vpack.c.b16 %v2008, %v2007
        %2041 = vmatprep.subr.bf16.mxu0 0
        %2042 = vmatpush1.bf16.msra.mxu0 %v2016
        %2043 = vmatprep.subr.bf16.mxu0 0
        %2044 = vmatpush1.bf16.msra.mxu0 %v2015
        %2045 = vmatprep.subr.bf16.mxu0 0
        %2046 = vmatpush1.bf16.msra.mxu0 %v2014
        %2047 = vmatprep.subr.bf16.mxu0 0
        %2048 = vmatpush1.bf16.msra.mxu0 %v2013
        %2049 = vmatprep.subr.bf16.mxu0 0
        %2050 = vmatpush1.bf16.msra.mxu0 %v2012
        %2051 = vmatprep.subr.bf16.mxu0 0
        %2052 = vmatpush1.bf16.msra.mxu0 %v2011
        %2053 = vmatprep.subr.bf16.mxu0 0
        %2054 = vmatpush1.bf16.msra.mxu0 %v2010
        %2055 = vmatprep.subr.bf16.mxu0 0
        %2056 = vmatpush1.bf16.msra.mxu0 %v2009
        %2057 = vmatprep.subr.bf16.mxu0 0
        %2058 = vmatpush2.bf16.msra.mxu0 %v2024
        %2059 = vmatprep.subr.bf16.mxu0 0
        %2060 = vmatpush2.bf16.msra.mxu0 %v2023
        %2061 = vmatprep.subr.bf16.mxu0 0
        %2062 = vmatpush2.bf16.msra.mxu0 %v2022
        %2063 = vmatprep.subr.bf16.mxu0 0
        %2064 = vmatpush2.bf16.msra.mxu0 %v2021
        %2065 = vmatprep.subr.bf16.mxu0 0
        %2066 = vmatpush2.bf16.msra.mxu0 %v2020
        %2067 = vmatprep.subr.bf16.mxu0 0
        %2068 = vmatpush2.bf16.msra.mxu0 %v2019
        %2069 = vmatprep.subr.bf16.mxu0 0
        %2070 = vmatpush2.bf16.msra.mxu0 %v2018
        %2071 = vmatprep.subr.bf16.mxu0 0
        %2072 = vmatpush2.bf16.msra.mxu0 %v2017
        %2073 = vmatprep.mubr.bf16.mxu0 %v1908
        %2074 = vmatmul.mubr.bf16.gmra.mxu0 %v1907
        %v2075 = vpop.f32.mrf.mxu0
        %v2076 = vadd.f32 %v1944, %v2075
        %v2077 = vpop.f32.mrf.mxu0
        %v2078 = vpop.f32.mrf.mxu0
        %v2079 = vadd.f32 %v1944, %v2078
        %v2080 = vpop.f32.mrf.mxu0
        %2081 = vdwg.mxu0
        %v2082 = vadd.f32 %v2076, %v1721
        %v2083 = vadd.f32 %v2079, %v1722
        %2084 = vst [vmem:[#allocation2] sm:$0xff] %v2082
        %2085 = vst [vmem:[#allocation2 + $0x8] sm:$0xff] %v2083
        %p2086 = scmp.eq.s32.totalorder %s24, 1
        // Predicated region
        $region61: #{gpt_layers_forward.1} parent=43 // pred_check
          %p2087 = pneg %p2086
        $region62: #{gpt_layers_forward.1} parent=43 // pred_check_branch
          %2089 = sbr.rel (%p2087) target = $region64
        $region63: #{gpt_layers_forward.1} parent=43 // pred_region
          %2090 = vst [vmem:[#allocation10] sm:$0xff] %v2082
          %2091 = vst [vmem:[#allocation10 + $0x8] sm:$0xff] %v2083
        $region64: #{gpt_layers_forward.1} parent=43 // pred_fallthru
          _
        // Predicated region
        $region65: #{gpt_layers_forward.1} parent=43 // pred_check
          %p2092 = pneg %p188
        $region66: #{gpt_layers_forward.1} parent=43 // pred_check_branch
          %2094 = sbr.rel (%p2092) target = $region68
        $region67: #{gpt_layers_forward.1} parent=43 // pred_region
          %s2096 = ssub.s32 256, 256
          %2097 = vsyncadd [#allocation6], %s2096
          %s2098 = sshll.u32 [#allocation10], 4
          %s2099 = int_to_ptr.vmem [resolvable:$true] %s2098
          %2104 = dma.vmem_to_hbm [thread:$0]  %s2099, 256, %s6, [#allocation6], 128, 128, 8
        $region68: #{gpt_layers_forward.1} parent=43 // pred_fallthru
          _
        // Predicated region
        $region69: #{gpt_layers_forward.1} parent=43 // pred_check
          %p2105 = pneg %p188
        $region70: #{gpt_layers_forward.1} parent=43 // pred_check_branch
          %2107 = sbr.rel (%p2105) target = $region72
        $region71: #{gpt_layers_forward.1} parent=43 // pred_region
          %2108 = dma.done [#allocation6], 256
        $region72: #{gpt_layers_forward.1} parent=43 // pred_fallthru
          _
      $region44: #{gpt_layers_forward.1} parent=5 // pred_fallthru
        _
      %p2109 = scmp.le.s32.totalorder 2, %s19
      // Predicated region
      $region73: #{gpt_layers_forward.1} parent=5 // pred_check
        %p2110 = pneg %p2109
      $region74: #{gpt_layers_forward.1} parent=5 // pred_check_branch
        %2112 = sbr.rel (%p2110) target = $region76
      $region75: #{gpt_layers_forward.1} parent=5 // pred_region
        %s2113 = ssub.s32 %s19, 2
      $region76: #{gpt_layers_forward.1} parent=5 // pred_fallthru
        _
    $region6: #{gpt_layers_forward.1} parent=1 // loop_footer
      %s23 = sadd.s32 1, %s19
    $region7: #{gpt_layers_forward.1} parent=1 // loop_footer_branch
      %18 = sbr.rel target = $region3
    $region8: #{gpt_layers_forward.1} parent=1 // loop_exit
      _
    %2114 = vsyncpa [#allocation5], 1
    %s2115 = scalar_lea.sflag [#allocation5], 1
    %2116 = vsyncpa %s2115, 1
    %2117 = vsyncpa [#allocation8], 1
    %s2118 = scalar_lea.sflag [#allocation8], 1
    %2119 = vsyncpa %s2118, 1
    %2120 = vsyncpa [#allocation6], 1
    %s2121 = scalar_lea.sflag [#allocation6], 1
    %2122 = vsyncpa %s2121, 1

</llo_original>
